<compile_context>
chip_gen: v7x
topology: tpu7x:2x2x1
jax: 0.10.0
libtpu: 0.0.40
codegen_flags: <defaults>
</compile_context>

<pallas_src>
import jax
import jax.numpy as jnp
from jax import lax
from jax.experimental import pallas as pl
from jax.experimental.pallas import tpu as pltpu

F_IN = 22   # input_size = 2*T + 2, T = 10
HID = 32    # hidden_dim


def _softplus(x):
    # numerically stable softplus, matches F.softplus default
    return jnp.maximum(x, 0.0) + jnp.log(1.0 + jnp.exp(-jnp.abs(x)))


def _round_up(v, m):
    return (v + m - 1) // m * m


# --------------------------- fused Pallas kernel ----------------------------

def a2c_kernel(x_ref, ea_ref, src_ref, dst_ref,
               w1_ref, b1_ref, w2_ref, b2_ref, wx_ref, wh_ref, bhv_ref,
               out_ref):
    """One graph per grid step; weight slabs are VMEM-resident across grid."""
    dt = w1_ref.dtype                       # matmul operand dtype (f32 or bf16)
    x = x_ref[...]                          # [Np, F]  f32
    ea = ea_ref[...].astype(dt)             # [Ep, F]
    n = x.shape[0]
    e = ea.shape[0]

    # gather / scatter one-hots built in-kernel from int32 indices (VPU).
    # padded edges carry src/dst = -1 -> all-zero rows -> exact masking.
    node_iota = lax.broadcasted_iota(jnp.int32, (e, n), 1)        # [Ep, Np]
    gi = (src_ref[...] == node_iota).astype(dt)                   # [Ep, Np]
    gj = (dst_ref[...] == node_iota).astype(dt)                   # [Ep, Np]

    x_dt = x.astype(dt)
    x_i = jnp.dot(gi, x_dt, preferred_element_type=dt)            # [Ep, F]
    x_j = jnp.dot(gj, x_dt, preferred_element_type=dt)            # [Ep, F]

    # fused (actor | critic) EdgeConv first layer, one ReLU over [Ep, 64]
    h1 = (jnp.dot(x_i, w1_ref[0], preferred_element_type=jnp.float32)
          + jnp.dot(x_j, w1_ref[1], preferred_element_type=jnp.float32)
          + jnp.dot(ea, w1_ref[2], preferred_element_type=jnp.float32)
          + b1_ref[...])
    h1 = jnp.maximum(h1, 0.0)                                     # [Ep, 64]

    # second layer (block-diagonal weights keep actor cols 0:32, critic 32:64)
    h2 = (jnp.dot(h1.astype(dt), w2_ref[...],
                  preferred_element_type=jnp.float32) + b2_ref[...])  # [Ep, 64]

    # ONE scatter-add at edge_index[0], expressed as a transposed contraction
    h_scat = lax.dot_general(gi, h2.astype(dt),
                             dimension_numbers=(((0,), (0,)), ((), ())),
                             preferred_element_type=jnp.float32)  # [Np, 64]

    # fused heads: cols 0:2 = mu/sigma/alpha pre-activations, col 3 = per-node
    # critic contribution (bias added after the node sum).
    pn = (jnp.dot(x_dt, wx_ref[...], preferred_element_type=jnp.float32)
          + jnp.dot(h_scat.astype(dt), wh_ref[...],
                    preferred_element_type=jnp.float32))          # [Np, 4]
    bhv = bhv_ref[...]                                            # [1, 4]

    heads = _softplus(pn[:, 0:3] + bhv[:, 0:3])                   # [Np, 3]
    v = jnp.sum(pn[:, 3:4], axis=0, keepdims=True) + bhv[:, 3:4]  # [1, 1]

    # two direct slice stores (no lane-axis concatenate)
    out_ref[:, 0:3] = heads
    out_ref[:, 3:4] = jnp.broadcast_to(v, (n, 1))


# --------------------------- parameter fusion (once) ------------------------

def fuse_params(params, matmul_dtype=jnp.float32):
    """Fuse raw per-layer params into 7 VMEM slabs. Call ONCE at init."""
    (w1a_xi, w1a_xj, w1a_e, b1a, w2a, b2a,
     wmu_x, wmu_h, bmu, wsg_x, wsg_h, bsg, wal_x, wal_h, bal,
     w1c_xi, w1c_xj, w1c_e, b1c, w2c, b2c,
     wv_x, wv_h, bv) = params

    w1 = jnp.stack([jnp.concatenate([w1a_xi, w1c_xi], axis=1),
                    jnp.concatenate([w1a_xj, w1c_xj], axis=1),
                    jnp.concatenate([w1a_e, w1c_e], axis=1)], axis=0)   # [3,22,64]
    b1 = jnp.concatenate([b1a, b1c], axis=1)                            # [1,64]

    z = jnp.zeros((HID, HID), jnp.float32)
    w2 = jnp.concatenate(
        [jnp.concatenate([w2a, z], axis=1),
         jnp.concatenate([z, w2c], axis=1)], axis=0)                    # [64,64]
    b2 = jnp.concatenate([b2a, b2c], axis=1)                            # [1,64]

    wx = jnp.concatenate([wmu_x, wsg_x, wal_x, wv_x], axis=1)           # [22,4]
    wh = jnp.concatenate(
        [jnp.concatenate([wmu_h, wsg_h, wal_h,
                          jnp.zeros((HID, 1), jnp.float32)], axis=1),
         jnp.concatenate([jnp.zeros((HID, 3), jnp.float32), wv_h], axis=1)],
        axis=0)                                                          # [64,4]
    bhv = jnp.concatenate([bmu, bsg, bal, bv], axis=1)                   # [1,4]

    dt = matmul_dtype
    # biases stay f32 (elementwise math stays f32 on all chips, incl. v5e)
    return (w1.astype(dt), b1, w2.astype(dt), b2, wx.astype(dt),
            wh.astype(dt), bhv)


# --------------------------- batched forward wrapper ------------------------

def a2c_forward(x, edge_index, edge_attr, fused):
    """x: [B,N,22], edge_index: [2,E] (shared graph), edge_attr: [B,E,22]."""
    b_sz, n_nodes, f_in = x.shape
    e_edges = edge_attr.shape[1]
    n_p = _round_up(n_nodes, 8)
    e_p = _round_up(e_edges, 8)

    x_p = jnp.pad(x, ((0, 0), (0, n_p - n_nodes), (0, 0)))
    ea_p = jnp.pad(edge_attr, ((0, 0), (0, e_p - e_edges), (0, 0)))
    src = jnp.pad(edge_index[0].astype(jnp.int32), (0, e_p - e_edges),
                  constant_values=-1).reshape(e_p, 1)
    dst = jnp.pad(edge_index[1].astype(jnp.int32), (0, e_p - e_edges),
                  constant_values=-1).reshape(e_p, 1)

    def resident(shape):
        # same block index every grid step -> DMA'd once, stays VMEM-resident
        zero = (0,) * len(shape)
        return pl.BlockSpec(shape, lambda b, _z=zero: _z)

    w1, b1, w2, b2, wx, wh, bhv = fused
    in_specs = [
        pl.BlockSpec((None, n_p, f_in), lambda b: (b, 0, 0)),   # x   (per graph)
        pl.BlockSpec((None, e_p, f_in), lambda b: (b, 0, 0)),   # ea  (per graph)
        resident(src.shape), resident(dst.shape),
        resident(w1.shape), resident(b1.shape),
        resident(w2.shape), resident(b2.shape),
        resident(wx.shape), resident(wh.shape), resident(bhv.shape),
    ]

    out = pl.pallas_call(
        a2c_kernel,
        grid=(b_sz,),
        in_specs=in_specs,
        out_specs=pl.BlockSpec((None, n_p, 4), lambda b: (b, 0, 0)),
        out_shape=jax.ShapeDtypeStruct((b_sz, n_p, 4), jnp.float32),
        compiler_params=pltpu.CompilerParams(
            dimension_semantics=("parallel",)),
    )(x_p, ea_p, src, dst, w1, b1, w2, b2, wx, wh, bhv)

    mu = out[:, :n_nodes, 0:1]
    sigma = out[:, :n_nodes, 1:2]
    alpha = out[:, :n_nodes, 2:3]
    v = out[:, 0, 3:4]                 # [B, 1]
    return (mu, sigma), alpha, v


# ---------------- deterministic parameter init (PyTorch nn.Linear style) ----

def _init_linear(key, fan_in, fan_out):
    k = 1.0 / jnp.sqrt(jnp.float32(fan_in))
    kw, kb = jax.random.split(key)
    w = jax.random.uniform(kw, (fan_in, fan_out), jnp.float32, -k, k)
    b = jax.random.uniform(kb, (1, fan_out), jnp.float32, -k, k)
    return w, b


def init_params(key):
    ks = jax.random.split(key, 8)
    w1a, b1a = _init_linear(ks[0], 3 * F_IN, HID)     # actor EdgeConv mlp[0]
    w2a, b2a = _init_linear(ks[1], HID, HID)          # actor EdgeConv mlp[2]
    wmu, bmu = _init_linear(ks[2], F_IN + HID, 1)     # h_to_mu
    wsg, bsg = _init_linear(ks[3], F_IN + HID, 1)     # h_to_sigma
    wal, bal = _init_linear(ks[4], F_IN + HID, 1)     # h_to_concentration
    w1c, b1c = _init_linear(ks[5], 3 * F_IN, HID)     # critic EdgeConv mlp[0]
    w2c, b2c = _init_linear(ks[6], HID, HID)          # critic EdgeConv mlp[2]
    wv, bv = _init_linear(ks[7], F_IN + HID, 1)       # g_to_v
    return (
        w1a[:F_IN], w1a[F_IN:2 * F_IN], w1a[2 * F_IN:], b1a, w2a, b2a,
        wmu[:F_IN], wmu[F_IN:], bmu,
        wsg[:F_IN], wsg[F_IN:], bsg,
        wal[:F_IN], wal[F_IN:], bal,
        w1c[:F_IN], w1c[F_IN:2 * F_IN], w1c[2 * F_IN:], b1c, w2c, b2c,
        wv[:F_IN], wv[F_IN:], bv,
    )


# ---------------- plain-JAX single-graph reference (raw params) -------------

def a2c_reference(x, edge_index, edge_attr, params):
    (w1a_xi, w1a_xj, w1a_e, b1a, w2a, b2a,
     wmu_x, wmu_h, bmu, wsg_x, wsg_h, bsg, wal_x, wal_h, bal,
     w1c_xi, w1c_xj, w1c_e, b1c, w2c, b2c,
     wv_x, wv_h, bv) = params
    n = x.shape[0]
    src, dst = edge_index[0], edge_index[1]
    x_i, x_j = x[src], x[dst]

    def conv(w_xi, w_xj, w_e, b1, w2, b2):
        h = jnp.maximum(x_i @ w_xi + x_j @ w_xj + edge_attr @ w_e + b1, 0.0)
        h = h @ w2 + b2
        return jnp.zeros((n, HID), jnp.float32).at[src].add(h)

    h_a = conv(w1a_xi, w1a_xj, w1a_e, b1a, w2a, b2a)
    h_c = conv(w1c_xi, w1c_xj, w1c_e, b1c, w2c, b2c)
    mu = jax.nn.softplus(x @ wmu_x + h_a @ wmu_h + bmu)
    sg = jax.nn.softplus(x @ wsg_x + h_a @ wsg_h + bsg)
    al = jax.nn.softplus(x @ wal_x + h_a @ wal_h + bal)
    s_x = jnp.sum(x, axis=0)
    s_h = jnp.sum(h_c, axis=0)
    v = s_x @ wv_x + s_h @ wv_h + bv[0]
    return (mu, sg), al, v


# --------------------------------- driver -----------------------------------

if __name__ == "__main__":
    key = jax.random.PRNGKey(0)
    k_x, k_e, k_idx, k_p = jax.random.split(key, 4)

    B = 4         # batched observations (same graph topology, as in A2C rollouts)
    N_NODES = 10  # exercises the N/E padding-to-8 path
    N_EDGES = 18

    x = jax.random.normal(k_x, (B, N_NODES, F_IN), jnp.float32)
    edge_attr = jax.random.normal(k_e, (B, N_EDGES, F_IN), jnp.float32)
    edge_index = jax.random.randint(k_idx, (2, N_EDGES), 0, N_NODES, jnp.int32)

    params = init_params(k_p)
    fused = fuse_params(params)                     # fused ONCE, outside hot path
    # NOTE: fuse_params(params, matmul_dtype=jnp.bfloat16) enables bf16 MXU
    # operands on v6e/v7x (f32 accumulation); demo asserts the f32 path.

    fwd = jax.jit(a2c_forward)
    (mu, sigma), alpha, v = fwd(x, edge_index, edge_attr, fused)
    jax.block_until_ready((mu, sigma, alpha, v))

    ref = jax.vmap(lambda xb, eb: a2c_reference(xb, edge_index, eb, params))
    (mu_r, sg_r), al_r, v_r = ref(x, edge_attr)

    assert mu.shape == (B, N_NODES, 1) and sigma.shape == (B, N_NODES, 1)
    assert alpha.shape == (B, N_NODES, 1) and v.shape == (B, 1)
    assert jnp.allclose(mu, mu_r, rtol=1e-3, atol=1e-3)
    assert jnp.allclose(sigma, sg_r, rtol=1e-3, atol=1e-3)
    assert jnp.allclose(alpha, al_r, rtol=1e-3, atol=1e-3)
    assert jnp.allclose(v, v_r, rtol=1e-3, atol=1e-3)

    print("KERNEL_OK")
</pallas_src>

<mosaic_0001>
module attributes {stable_mosaic.version = 11 : i64} {
  func.func @a2c_kernel(%arg0: i32, %arg1: memref<1x16x22xf32, #tpu.memory_space<vmem>>, %arg2: memref<1x24x22xf32, #tpu.memory_space<vmem>>, %arg3: memref<24x1xi32, #tpu.memory_space<vmem>>, %arg4: memref<24x1xi32, #tpu.memory_space<vmem>>, %arg5: memref<3x22x64xf32, #tpu.memory_space<vmem>>, %arg6: memref<1x64xf32, #tpu.memory_space<vmem>>, %arg7: memref<64x64xf32, #tpu.memory_space<vmem>>, %arg8: memref<1x64xf32, #tpu.memory_space<vmem>>, %arg9: memref<22x4xf32, #tpu.memory_space<vmem>>, %arg10: memref<64x4xf32, #tpu.memory_space<vmem>>, %arg11: memref<1x4xf32, #tpu.memory_space<vmem>>, %arg12: memref<1x16x4xf32, #tpu.memory_space<vmem>>) attributes {dimension_semantics = [#tpu.dimension_semantics<parallel>], iteration_bounds = array<i64: 4>, scalar_prefetch = 0 : i64, scratch_operands = 0 : i64, tpu.core_type = #tpu.core_type<tc>, window_params = [{transform_indices = @transform_0, window_bounds = array<i64: 1, 16, 22>}, {transform_indices = @transform_1, window_bounds = array<i64: 1, 24, 22>}, {pipeline_mode = #tpu.pipeline_mode<synchronous>, transform_indices = @transform_2, window_bounds = array<i64: 24, 1>}, {pipeline_mode = #tpu.pipeline_mode<synchronous>, transform_indices = @transform_3, window_bounds = array<i64: 24, 1>}, {pipeline_mode = #tpu.pipeline_mode<synchronous>, transform_indices = @transform_4, window_bounds = array<i64: 3, 22, 64>}, {pipeline_mode = #tpu.pipeline_mode<synchronous>, transform_indices = @transform_5, window_bounds = array<i64: 1, 64>}, {pipeline_mode = #tpu.pipeline_mode<synchronous>, transform_indices = @transform_6, window_bounds = array<i64: 64, 64>}, {pipeline_mode = #tpu.pipeline_mode<synchronous>, transform_indices = @transform_7, window_bounds = array<i64: 1, 64>}, {pipeline_mode = #tpu.pipeline_mode<synchronous>, transform_indices = @transform_8, window_bounds = array<i64: 22, 4>}, {pipeline_mode = #tpu.pipeline_mode<synchronous>, transform_indices = @transform_9, window_bounds = array<i64: 64, 4>}, {pipeline_mode = #tpu.pipeline_mode<synchronous>, transform_indices = @transform_10, window_bounds = array<i64: 1, 4>}, {transform_indices = @transform_11, window_bounds = array<i64: 1, 16, 4>}]} {
    %c0 = arith.constant 0 : index
    %c0_0 = arith.constant 0 : index
    %c0_1 = arith.constant 0 : index
    %0 = vector.load %arg1[%c0, %c0_0, %c0_1] : memref<1x16x22xf32, #tpu.memory_space<vmem>>, vector<1x16x22xf32>
    %1 = vector.shape_cast %0 : vector<1x16x22xf32> to vector<16x22xf32>
    %c0_2 = arith.constant 0 : index
    %c0_3 = arith.constant 0 : index
    %c0_4 = arith.constant 0 : index
    %2 = vector.load %arg2[%c0_2, %c0_3, %c0_4] : memref<1x24x22xf32, #tpu.memory_space<vmem>>, vector<1x24x22xf32>
    %3 = vector.shape_cast %2 : vector<1x24x22xf32> to vector<24x22xf32>
    %4 = tpu.iota {dimensions = array<i32: 1>} : vector<24x16xi32>
    %c0_5 = arith.constant 0 : index
    %c0_6 = arith.constant 0 : index
    %5 = vector.load %arg3[%c0_5, %c0_6] : memref<24x1xi32, #tpu.memory_space<vmem>>, vector<24x1xi32>
    %6 = vector.broadcast %5 : vector<24x1xi32> to vector<24x16xi32>
    %7 = arith.cmpi eq, %6, %4 : vector<24x16xi32>
    %8 = arith.extui %7 : vector<24x16xi1> to vector<24x16xi32>
    %9 = arith.sitofp %8 : vector<24x16xi32> to vector<24x16xf32>
    %c0_7 = arith.constant 0 : index
    %c0_8 = arith.constant 0 : index
    %10 = vector.load %arg4[%c0_7, %c0_8] : memref<24x1xi32, #tpu.memory_space<vmem>>, vector<24x1xi32>
    %11 = vector.broadcast %10 : vector<24x1xi32> to vector<24x16xi32>
    %12 = arith.cmpi eq, %11, %4 : vector<24x16xi32>
    %13 = arith.extui %12 : vector<24x16xi1> to vector<24x16xi32>
    %14 = arith.sitofp %13 : vector<24x16xi32> to vector<24x16xf32>
    %cst = arith.constant dense<0.000000e+00> : vector<24x22xf32>
    %15 = tpu.matmul %9, %1, %cst {dimension_numbers = #tpu.dot_dimension_numbers<[1], [0], [0], [1], [0, 0, 1, 1], [], []>} : vector<24x16xf32>, vector<16x22xf32>, vector<24x22xf32> -> vector<24x22xf32>
    %cst_9 = arith.constant dense<0.000000e+00> : vector<24x22xf32>
    %16 = tpu.matmul %14, %1, %cst_9 {dimension_numbers = #tpu.dot_dimension_numbers<[1], [0], [0], [1], [0, 0, 1, 1], [], []>} : vector<24x16xf32>, vector<16x22xf32>, vector<24x22xf32> -> vector<24x22xf32>
    %c0_10 = arith.constant 0 : index
    %c0_11 = arith.constant 0 : index
    %c0_12 = arith.constant 0 : index
    %17 = vector.load %arg5[%c0_10, %c0_11, %c0_12] : memref<3x22x64xf32, #tpu.memory_space<vmem>>, vector<1x22x64xf32>
    %18 = vector.shape_cast %17 : vector<1x22x64xf32> to vector<22x64xf32>
    %cst_13 = arith.constant dense<0.000000e+00> : vector<24x64xf32>
    %19 = tpu.matmul %15, %18, %cst_13 {dimension_numbers = #tpu.dot_dimension_numbers<[1], [0], [0], [1], [0, 0, 1, 1], [], []>} : vector<24x22xf32>, vector<22x64xf32>, vector<24x64xf32> -> vector<24x64xf32>
    %c1 = arith.constant 1 : index
    %c0_14 = arith.constant 0 : index
    %c0_15 = arith.constant 0 : index
    %20 = vector.load %arg5[%c1, %c0_14, %c0_15] : memref<3x22x64xf32, #tpu.memory_space<vmem>>, vector<1x22x64xf32>
    %21 = vector.shape_cast %20 : vector<1x22x64xf32> to vector<22x64xf32>
    %cst_16 = arith.constant dense<0.000000e+00> : vector<24x64xf32>
    %22 = tpu.matmul %16, %21, %cst_16 {dimension_numbers = #tpu.dot_dimension_numbers<[1], [0], [0], [1], [0, 0, 1, 1], [], []>} : vector<24x22xf32>, vector<22x64xf32>, vector<24x64xf32> -> vector<24x64xf32>
    %23 = arith.addf %19, %22 : vector<24x64xf32>
    %c2 = arith.constant 2 : index
    %c0_17 = arith.constant 0 : index
    %c0_18 = arith.constant 0 : index
    %24 = vector.load %arg5[%c2, %c0_17, %c0_18] : memref<3x22x64xf32, #tpu.memory_space<vmem>>, vector<1x22x64xf32>
    %25 = vector.shape_cast %24 : vector<1x22x64xf32> to vector<22x64xf32>
    %cst_19 = arith.constant dense<0.000000e+00> : vector<24x64xf32>
    %26 = tpu.matmul %3, %25, %cst_19 {dimension_numbers = #tpu.dot_dimension_numbers<[1], [0], [0], [1], [0, 0, 1, 1], [], []>} : vector<24x22xf32>, vector<22x64xf32>, vector<24x64xf32> -> vector<24x64xf32>
    %27 = arith.addf %23, %26 : vector<24x64xf32>
    %c0_20 = arith.constant 0 : index
    %c0_21 = arith.constant 0 : index
    %28 = vector.load %arg6[%c0_20, %c0_21] : memref<1x64xf32, #tpu.memory_space<vmem>>, vector<1x64xf32>
    %29 = vector.broadcast %28 : vector<1x64xf32> to vector<24x64xf32>
    %30 = arith.addf %27, %29 : vector<24x64xf32>
    %cst_22 = arith.constant 0.000000e+00 : f32
    %31 = vector.broadcast %cst_22 : f32 to vector<24x64xf32>
    %32 = arith.maximumf %30, %31 : vector<24x64xf32>
    %c0_23 = arith.constant 0 : index
    %c0_24 = arith.constant 0 : index
    %33 = vector.load %arg7[%c0_23, %c0_24] : memref<64x64xf32, #tpu.memory_space<vmem>>, vector<64x64xf32>
    %cst_25 = arith.constant dense<0.000000e+00> : vector<24x64xf32>
    %34 = tpu.matmul %32, %33, %cst_25 {dimension_numbers = #tpu.dot_dimension_numbers<[1], [0], [0], [1], [0, 0, 1, 1], [], []>} : vector<24x64xf32>, vector<64x64xf32>, vector<24x64xf32> -> vector<24x64xf32>
    %c0_26 = arith.constant 0 : index
    %c0_27 = arith.constant 0 : index
    %35 = vector.load %arg8[%c0_26, %c0_27] : memref<1x64xf32, #tpu.memory_space<vmem>>, vector<1x64xf32>
    %36 = vector.broadcast %35 : vector<1x64xf32> to vector<24x64xf32>
    %37 = arith.addf %34, %36 : vector<24x64xf32>
    %cst_28 = arith.constant dense<0.000000e+00> : vector<16x64xf32>
    %38 = tpu.matmul %9, %37, %cst_28 {dimension_numbers = #tpu.dot_dimension_numbers<[0], [0], [1], [1], [0, 1, 1, 1], [], []>} : vector<24x16xf32>, vector<24x64xf32>, vector<16x64xf32> -> vector<16x64xf32>
    %c0_29 = arith.constant 0 : index
    %c0_30 = arith.constant 0 : index
    %39 = vector.load %arg9[%c0_29, %c0_30] : memref<22x4xf32, #tpu.memory_space<vmem>>, vector<22x4xf32>
    %cst_31 = arith.constant dense<0.000000e+00> : vector<16x4xf32>
    %40 = tpu.matmul %1, %39, %cst_31 {dimension_numbers = #tpu.dot_dimension_numbers<[1], [0], [0], [1], [0, 0, 1, 1], [], []>} : vector<16x22xf32>, vector<22x4xf32>, vector<16x4xf32> -> vector<16x4xf32>
    %c0_32 = arith.constant 0 : index
    %c0_33 = arith.constant 0 : index
    %41 = vector.load %arg10[%c0_32, %c0_33] : memref<64x4xf32, #tpu.memory_space<vmem>>, vector<64x4xf32>
    %cst_34 = arith.constant dense<0.000000e+00> : vector<16x4xf32>
    %42 = tpu.matmul %38, %41, %cst_34 {dimension_numbers = #tpu.dot_dimension_numbers<[1], [0], [0], [1], [0, 0, 1, 1], [], []>} : vector<16x64xf32>, vector<64x4xf32>, vector<16x4xf32> -> vector<16x4xf32>
    %43 = arith.addf %40, %42 : vector<16x4xf32>
    %c0_35 = arith.constant 0 : index
    %c0_36 = arith.constant 0 : index
    %44 = vector.load %arg11[%c0_35, %c0_36] : memref<1x4xf32, #tpu.memory_space<vmem>>, vector<1x4xf32>
    %45 = vector.extract_strided_slice %43 {offsets = [0, 0], sizes = [16, 3], strides = [1, 1]} : vector<16x4xf32> to vector<16x3xf32>
    %46 = vector.extract_strided_slice %44 {offsets = [0, 0], sizes = [1, 3], strides = [1, 1]} : vector<1x4xf32> to vector<1x3xf32>
    %47 = vector.broadcast %46 : vector<1x3xf32> to vector<16x3xf32>
    %48 = arith.addf %45, %47 : vector<16x3xf32>
    %cst_37 = arith.constant 0.000000e+00 : f32
    %49 = vector.broadcast %cst_37 : f32 to vector<16x3xf32>
    %50 = arith.maximumf %48, %49 : vector<16x3xf32>
    %51 = math.absf %48 : vector<16x3xf32>
    %cst_38 = arith.constant 0.000000e+00 : f32
    %52 = vector.broadcast %cst_38 : f32 to vector<16x3xf32>
    %53 = arith.subf %52, %51 : vector<16x3xf32>
    %54 = math.exp %53 : vector<16x3xf32>
    %cst_39 = arith.constant 1.000000e+00 : f32
    %55 = vector.broadcast %cst_39 : f32 to vector<16x3xf32>
    %56 = arith.addf %55, %54 : vector<16x3xf32>
    %57 = math.log %56 : vector<16x3xf32>
    %58 = arith.addf %50, %57 : vector<16x3xf32>
    %59 = vector.extract_strided_slice %43 {offsets = [0, 3], sizes = [16, 1], strides = [1, 1]} : vector<16x4xf32> to vector<16x1xf32>
    %cst_40 = arith.constant dense<0.000000e+00> : vector<1xf32>
    %60 = vector.multi_reduction <add>, %59, %cst_40 [0] : vector<16x1xf32> to vector<1xf32>
    %61 = vector.shape_cast %60 : vector<1xf32> to vector<1x1xf32>
    %62 = vector.extract_strided_slice %44 {offsets = [0, 3], sizes = [1, 1], strides = [1, 1]} : vector<1x4xf32> to vector<1x1xf32>
    %63 = arith.addf %61, %62 : vector<1x1xf32>
    %c0_41 = arith.constant 0 : index
    %c0_42 = arith.constant 0 : index
    %c0_43 = arith.constant 0 : index
    %64 = vector.load %arg12[%c0_41, %c0_42, %c0_43] : memref<1x16x4xf32, #tpu.memory_space<vmem>>, vector<1x16x3xf32>
    %65 = vector.shape_cast %64 : vector<1x16x3xf32> to vector<16x3xf32>
    %66 = vector.shape_cast %58 : vector<16x3xf32> to vector<1x16x3xf32>
    tpu.vector_store %arg12[%c0_41, %c0_42, %c0_43], %66 {strides = array<i32>} : memref<1x16x4xf32, #tpu.memory_space<vmem>>, vector<1x16x3xf32>,
    %67 = vector.shape_cast %63 : vector<1x1xf32> to vector<1x1xf32>
    %68 = vector.broadcast %67 : vector<1x1xf32> to vector<16x1xf32>
    %c0_44 = arith.constant 0 : index
    %c0_45 = arith.constant 0 : index
    %c3 = arith.constant 3 : index
    %69 = vector.load %arg12[%c0_44, %c0_45, %c3] : memref<1x16x4xf32, #tpu.memory_space<vmem>>, vector<1x16x1xf32>
    %70 = vector.shape_cast %69 : vector<1x16x1xf32> to vector<16x1xf32>
    %71 = vector.shape_cast %68 : vector<16x1xf32> to vector<1x16x1xf32>
    tpu.vector_store %arg12[%c0_44, %c0_45, %c3], %71 {strides = array<i32>} : memref<1x16x4xf32, #tpu.memory_space<vmem>>, vector<1x16x1xf32>,
    return
  }
  func.func @transform_0(%arg0: i32) -> (i32, i32, i32) {
    %c0_i32 = arith.constant 0 : i32
    %c0_i32_0 = arith.constant 0 : i32
    %c0_i32_1 = arith.constant 0 : i32
    return %arg0, %c0_i32, %c0_i32_0 : i32, i32, i32
  }
  func.func @transform_1(%arg0: i32) -> (i32, i32, i32) {
    %c0_i32 = arith.constant 0 : i32
    %c0_i32_0 = arith.constant 0 : i32
    %c0_i32_1 = arith.constant 0 : i32
    return %arg0, %c0_i32, %c0_i32_0 : i32, i32, i32
  }
  func.func @transform_2(%arg0: i32) -> (i32, i32) {
    %c0_i32 = arith.constant 0 : i32
    %c0_i32_0 = arith.constant 0 : i32
    %c0_i32_1 = arith.constant 0 : i32
    return %c0_i32, %c0_i32_0 : i32, i32
  }
  func.func @transform_3(%arg0: i32) -> (i32, i32) {
    %c0_i32 = arith.constant 0 : i32
    %c0_i32_0 = arith.constant 0 : i32
    %c0_i32_1 = arith.constant 0 : i32
    return %c0_i32, %c0_i32_0 : i32, i32
  }
  func.func @transform_4(%arg0: i32) -> (i32, i32, i32) {
    %c0_i32 = arith.constant 0 : i32
    %c0_i32_0 = arith.constant 0 : i32
    %c0_i32_1 = arith.constant 0 : i32
    %c0_i32_2 = arith.constant 0 : i32
    return %c0_i32, %c0_i32_0, %c0_i32_1 : i32, i32, i32
  }
  func.func @transform_5(%arg0: i32) -> (i32, i32) {
    %c0_i32 = arith.constant 0 : i32
    %c0_i32_0 = arith.constant 0 : i32
    %c0_i32_1 = arith.constant 0 : i32
    return %c0_i32, %c0_i32_0 : i32, i32
  }
  func.func @transform_6(%arg0: i32) -> (i32, i32) {
    %c0_i32 = arith.constant 0 : i32
    %c0_i32_0 = arith.constant 0 : i32
    %c0_i32_1 = arith.constant 0 : i32
    return %c0_i32, %c0_i32_0 : i32, i32
  }
  func.func @transform_7(%arg0: i32) -> (i32, i32) {
    %c0_i32 = arith.constant 0 : i32
    %c0_i32_0 = arith.constant 0 : i32
    %c0_i32_1 = arith.constant 0 : i32
    return %c0_i32, %c0_i32_0 : i32, i32
  }
  func.func @transform_8(%arg0: i32) -> (i32, i32) {
    %c0_i32 = arith.constant 0 : i32
    %c0_i32_0 = arith.constant 0 : i32
    %c0_i32_1 = arith.constant 0 : i32
    return %c0_i32, %c0_i32_0 : i32, i32
  }
  func.func @transform_9(%arg0: i32) -> (i32, i32) {
    %c0_i32 = arith.constant 0 : i32
    %c0_i32_0 = arith.constant 0 : i32
    %c0_i32_1 = arith.constant 0 : i32
    return %c0_i32, %c0_i32_0 : i32, i32
  }
  func.func @transform_10(%arg0: i32) -> (i32, i32) {
    %c0_i32 = arith.constant 0 : i32
    %c0_i32_0 = arith.constant 0 : i32
    %c0_i32_1 = arith.constant 0 : i32
    return %c0_i32, %c0_i32_0 : i32, i32
  }
  func.func @transform_11(%arg0: i32) -> (i32, i32, i32) {
    %c0_i32 = arith.constant 0 : i32
    %c0_i32_0 = arith.constant 0 : i32
    %c0_i32_1 = arith.constant 0 : i32
    return %arg0, %c0_i32, %c0_i32_0 : i32, i32, i32
  }
}

</mosaic_0001>

<llo_original>
// kernel: a2c_forward.1
$region0: #{a2c_forward.1}
  #allocation0 [shape = 'u32[]', space=smem, size = 0x4, offset = 0x4, fixed_abs, tag = 'smem constant byte address 0x4 - core index']
  #allocation1 [shape = 'u32[144,128]{1,0:T(1,128)}', space=vmem, size = 0x12000, scoped, tag = 'internal scratch']
  %s0 = inlined_call_operand.vmem [shape: f32[4,16,22], index: 0, kind: input, shape index: {}]
  %s1 = inlined_call_operand.vmem [shape: f32[4,24,22], index: 1, kind: input, shape index: {}]
  %s2 = inlined_call_operand.vmem [shape: s32[24,1], index: 2, kind: input, shape index: {}]
  %s3 = inlined_call_operand.vmem [shape: s32[24,1], index: 3, kind: input, shape index: {}]
  %s4 = inlined_call_operand.vmem [shape: f32[3,22,64], index: 4, kind: input, shape index: {}]
  %s5 = inlined_call_operand.vmem [shape: f32[1,64], index: 5, kind: input, shape index: {}]
  %s6 = inlined_call_operand.vmem [shape: f32[64,64], index: 6, kind: input, shape index: {}]
  %s7 = inlined_call_operand.vmem [shape: f32[1,64], index: 7, kind: input, shape index: {}]
  %s8 = inlined_call_operand.vmem [shape: f32[22,4], index: 8, kind: input, shape index: {}]
  %s9 = inlined_call_operand.vmem [shape: f32[64,4], index: 9, kind: input, shape index: {}]
  %s10 = inlined_call_operand.vmem [shape: f32[1,4], index: 10, kind: input, shape index: {}]
  %s11 = inlined_call_operand.vmem [shape: f32[4,16,4], index: 11, kind: output, shape index: {}]
  %s12 = sld [smem:[#allocation0]]
  $region77: #{a2c_forward.1} parent=0
    _
  %s14 = ssub.s32 1, %s12
  %s15 = scalar_select 0, %s14, %s12
  loop: start=0, step=1, limit=6
  $region2: #{a2c_forward.1} parent=0 // loop_pre_header
    _
  $region3: #{a2c_forward.1} parent=0 // loop_header
    %s17 = sphi 0, %s21
    %p18 = scmp.ge.s32.totalorder %s17, 6
    %s27 = sphi 0, %s29
    %s30 = sphi 0, %s27
    %s31 = sphi 0, %s30
    %s47 = sphi 0, %s31
    %s53 = sphi 0, %s55
    %s56 = sphi 0, %s53
    %s57 = sphi 0, %s56
    %s73 = sphi 0, %s57
    %s77 = sphi 0, %s77
    %s79 = sphi 0, %s77
    %s80 = sphi 0, %s79
    %s94 = sphi 0, %s80
    %s98 = sphi 0, %s98
    %s100 = sphi 0, %s98
    %s101 = sphi 0, %s100
    %s115 = sphi 0, %s101
    %s119 = sphi 0, %s119
    %s121 = sphi 0, %s119
    %s122 = sphi 0, %s121
    %s136 = sphi 0, %s122
    %s140 = sphi 0, %s140
    %s142 = sphi 0, %s140
    %s143 = sphi 0, %s142
    %s157 = sphi 0, %s143
    %s161 = sphi 0, %s161
    %s163 = sphi 0, %s161
    %s164 = sphi 0, %s163
    %s178 = sphi 0, %s164
    %s182 = sphi 0, %s182
    %s184 = sphi 0, %s182
    %s185 = sphi 0, %s184
    %s199 = sphi 0, %s185
    %s203 = sphi 0, %s203
    %s205 = sphi 0, %s203
    %s206 = sphi 0, %s205
    %s220 = sphi 0, %s206
    %s224 = sphi 0, %s224
    %s226 = sphi 0, %s224
    %s227 = sphi 0, %s226
    %s241 = sphi 0, %s227
    %s245 = sphi 0, %s245
    %s247 = sphi 0, %s245
    %s248 = sphi 0, %s247
    %s262 = sphi 0, %s248
    %s268 = sphi 0, %s270
    %s271 = sphi 0, %s268
    %s272 = sphi 0, %s271
    %s288 = sphi 0, %s272
  $region4: #{a2c_forward.1} parent=0 // loop_header_branch
    %20 = sbr.rel (%p18) target = $region8
  $region5: #{a2c_forward.1} parent=0 // loop_body
    %s22 = ssub.s32 %s17, 1
    %s23 = ssub.s32 %s17, 2
    %s24 = sadd.s32 %s17, 1
    %s25 = ssub.s32 %s17, %s24
    %p26 = scmp.eq.s32.totalorder %s25, 0
    %s28 = sadd.s32 %s27, 1
    %s29 = scalar_select %p26, %s27, %s28
    %p32 = pneg %p26
    %p33 = scmp.eq.s32.totalorder %s17, 3
    %p34 = por %p32, %p33
    %p35 = scmp.ne.s32.totalorder %s27, %s30
    %p36 = scmp.eq.s32.totalorder %s17, 0
    %p37 = por %p35, %p36
    %p38 = scmp.ne.s32.totalorder %s27, %s30
    %p39 = scmp.eq.s32.totalorder %s22, 3
    %p40 = por %p38, %p39
    %p41 = scmp.ne.s32.totalorder %s30, %s31
    %p42 = scmp.eq.s32.totalorder %s22, 0
    %p43 = por %p41, %p42
    %p44 = scmp.ne.s32.totalorder %s30, %s31
    %p45 = scmp.eq.s32.totalorder %s23, 3
    %p46 = por %p44, %p45
    %p48 = scmp.ne.s32.totalorder %s31, %s47
    %p49 = scmp.eq.s32.totalorder %s23, 0
    %p50 = por %p48, %p49
    %s51 = ssub.s32 %s17, %s24
    %p52 = scmp.eq.s32.totalorder %s51, 0
    %s54 = sadd.s32 %s53, 1
    %s55 = scalar_select %p52, %s53, %s54
    %p58 = pneg %p52
    %p59 = scmp.eq.s32.totalorder %s17, 3
    %p60 = por %p58, %p59
    %p61 = scmp.ne.s32.totalorder %s53, %s56
    %p62 = scmp.eq.s32.totalorder %s17, 0
    %p63 = por %p61, %p62
    %p64 = scmp.ne.s32.totalorder %s53, %s56
    %p65 = scmp.eq.s32.totalorder %s22, 3
    %p66 = por %p64, %p65
    %p67 = scmp.ne.s32.totalorder %s56, %s57
    %p68 = scmp.eq.s32.totalorder %s22, 0
    %p69 = por %p67, %p68
    %p70 = scmp.ne.s32.totalorder %s56, %s57
    %p71 = scmp.eq.s32.totalorder %s23, 3
    %p72 = por %p70, %p71
    %p74 = scmp.ne.s32.totalorder %s57, %s73
    %p75 = scmp.eq.s32.totalorder %s23, 0
    %p76 = por %p74, %p75
    %s78 = sadd.s32 %s77, 1
    %p81 = scmp.eq.s32.totalorder %s17, 3
    %p82 = scmp.ne.s32.totalorder %s77, %s79
    %p83 = scmp.eq.s32.totalorder %s17, 0
    %p84 = por %p82, %p83
    %p85 = scmp.ne.s32.totalorder %s77, %s79
    %p86 = scmp.eq.s32.totalorder %s22, 3
    %p87 = por %p85, %p86
    %p88 = scmp.ne.s32.totalorder %s79, %s80
    %p89 = scmp.eq.s32.totalorder %s22, 0
    %p90 = por %p88, %p89
    %p91 = scmp.ne.s32.totalorder %s79, %s80
    %p92 = scmp.eq.s32.totalorder %s23, 3
    %p93 = por %p91, %p92
    %p95 = scmp.ne.s32.totalorder %s80, %s94
    %p96 = scmp.eq.s32.totalorder %s23, 0
    %p97 = por %p95, %p96
    %s99 = sadd.s32 %s98, 1
    %p102 = scmp.eq.s32.totalorder %s17, 3
    %p103 = scmp.ne.s32.totalorder %s98, %s100
    %p104 = scmp.eq.s32.totalorder %s17, 0
    %p105 = por %p103, %p104
    %p106 = scmp.ne.s32.totalorder %s98, %s100
    %p107 = scmp.eq.s32.totalorder %s22, 3
    %p108 = por %p106, %p107
    %p109 = scmp.ne.s32.totalorder %s100, %s101
    %p110 = scmp.eq.s32.totalorder %s22, 0
    %p111 = por %p109, %p110
    %p112 = scmp.ne.s32.totalorder %s100, %s101
    %p113 = scmp.eq.s32.totalorder %s23, 3
    %p114 = por %p112, %p113
    %p116 = scmp.ne.s32.totalorder %s101, %s115
    %p117 = scmp.eq.s32.totalorder %s23, 0
    %p118 = por %p116, %p117
    %s120 = sadd.s32 %s119, 1
    %p123 = scmp.eq.s32.totalorder %s17, 3
    %p124 = scmp.ne.s32.totalorder %s119, %s121
    %p125 = scmp.eq.s32.totalorder %s17, 0
    %p126 = por %p124, %p125
    %p127 = scmp.ne.s32.totalorder %s119, %s121
    %p128 = scmp.eq.s32.totalorder %s22, 3
    %p129 = por %p127, %p128
    %p130 = scmp.ne.s32.totalorder %s121, %s122
    %p131 = scmp.eq.s32.totalorder %s22, 0
    %p132 = por %p130, %p131
    %p133 = scmp.ne.s32.totalorder %s121, %s122
    %p134 = scmp.eq.s32.totalorder %s23, 3
    %p135 = por %p133, %p134
    %p137 = scmp.ne.s32.totalorder %s122, %s136
    %p138 = scmp.eq.s32.totalorder %s23, 0
    %p139 = por %p137, %p138
    %s141 = sadd.s32 %s140, 1
    %p144 = scmp.eq.s32.totalorder %s17, 3
    %p145 = scmp.ne.s32.totalorder %s140, %s142
    %p146 = scmp.eq.s32.totalorder %s17, 0
    %p147 = por %p145, %p146
    %p148 = scmp.ne.s32.totalorder %s140, %s142
    %p149 = scmp.eq.s32.totalorder %s22, 3
    %p150 = por %p148, %p149
    %p151 = scmp.ne.s32.totalorder %s142, %s143
    %p152 = scmp.eq.s32.totalorder %s22, 0
    %p153 = por %p151, %p152
    %p154 = scmp.ne.s32.totalorder %s142, %s143
    %p155 = scmp.eq.s32.totalorder %s23, 3
    %p156 = por %p154, %p155
    %p158 = scmp.ne.s32.totalorder %s143, %s157
    %p159 = scmp.eq.s32.totalorder %s23, 0
    %p160 = por %p158, %p159
    %s162 = sadd.s32 %s161, 1
    %p165 = scmp.eq.s32.totalorder %s17, 3
    %p166 = scmp.ne.s32.totalorder %s161, %s163
    %p167 = scmp.eq.s32.totalorder %s17, 0
    %p168 = por %p166, %p167
    %p169 = scmp.ne.s32.totalorder %s161, %s163
    %p170 = scmp.eq.s32.totalorder %s22, 3
    %p171 = por %p169, %p170
    %p172 = scmp.ne.s32.totalorder %s163, %s164
    %p173 = scmp.eq.s32.totalorder %s22, 0
    %p174 = por %p172, %p173
    %p175 = scmp.ne.s32.totalorder %s163, %s164
    %p176 = scmp.eq.s32.totalorder %s23, 3
    %p177 = por %p175, %p176
    %p179 = scmp.ne.s32.totalorder %s164, %s178
    %p180 = scmp.eq.s32.totalorder %s23, 0
    %p181 = por %p179, %p180
    %s183 = sadd.s32 %s182, 1
    %p186 = scmp.eq.s32.totalorder %s17, 3
    %p187 = scmp.ne.s32.totalorder %s182, %s184
    %p188 = scmp.eq.s32.totalorder %s17, 0
    %p189 = por %p187, %p188
    %p190 = scmp.ne.s32.totalorder %s182, %s184
    %p191 = scmp.eq.s32.totalorder %s22, 3
    %p192 = por %p190, %p191
    %p193 = scmp.ne.s32.totalorder %s184, %s185
    %p194 = scmp.eq.s32.totalorder %s22, 0
    %p195 = por %p193, %p194
    %p196 = scmp.ne.s32.totalorder %s184, %s185
    %p197 = scmp.eq.s32.totalorder %s23, 3
    %p198 = por %p196, %p197
    %p200 = scmp.ne.s32.totalorder %s185, %s199
    %p201 = scmp.eq.s32.totalorder %s23, 0
    %p202 = por %p200, %p201
    %s204 = sadd.s32 %s203, 1
    %p207 = scmp.eq.s32.totalorder %s17, 3
    %p208 = scmp.ne.s32.totalorder %s203, %s205
    %p209 = scmp.eq.s32.totalorder %s17, 0
    %p210 = por %p208, %p209
    %p211 = scmp.ne.s32.totalorder %s203, %s205
    %p212 = scmp.eq.s32.totalorder %s22, 3
    %p213 = por %p211, %p212
    %p214 = scmp.ne.s32.totalorder %s205, %s206
    %p215 = scmp.eq.s32.totalorder %s22, 0
    %p216 = por %p214, %p215
    %p217 = scmp.ne.s32.totalorder %s205, %s206
    %p218 = scmp.eq.s32.totalorder %s23, 3
    %p219 = por %p217, %p218
    %p221 = scmp.ne.s32.totalorder %s206, %s220
    %p222 = scmp.eq.s32.totalorder %s23, 0
    %p223 = por %p221, %p222
    %s225 = sadd.s32 %s224, 1
    %p228 = scmp.eq.s32.totalorder %s17, 3
    %p229 = scmp.ne.s32.totalorder %s224, %s226
    %p230 = scmp.eq.s32.totalorder %s17, 0
    %p231 = por %p229, %p230
    %p232 = scmp.ne.s32.totalorder %s224, %s226
    %p233 = scmp.eq.s32.totalorder %s22, 3
    %p234 = por %p232, %p233
    %p235 = scmp.ne.s32.totalorder %s226, %s227
    %p236 = scmp.eq.s32.totalorder %s22, 0
    %p237 = por %p235, %p236
    %p238 = scmp.ne.s32.totalorder %s226, %s227
    %p239 = scmp.eq.s32.totalorder %s23, 3
    %p240 = por %p238, %p239
    %p242 = scmp.ne.s32.totalorder %s227, %s241
    %p243 = scmp.eq.s32.totalorder %s23, 0
    %p244 = por %p242, %p243
    %s246 = sadd.s32 %s245, 1
    %p249 = scmp.eq.s32.totalorder %s17, 3
    %p250 = scmp.ne.s32.totalorder %s245, %s247
    %p251 = scmp.eq.s32.totalorder %s17, 0
    %p252 = por %p250, %p251
    %p253 = scmp.ne.s32.totalorder %s245, %s247
    %p254 = scmp.eq.s32.totalorder %s22, 3
    %p255 = por %p253, %p254
    %p256 = scmp.ne.s32.totalorder %s247, %s248
    %p257 = scmp.eq.s32.totalorder %s22, 0
    %p258 = por %p256, %p257
    %p259 = scmp.ne.s32.totalorder %s247, %s248
    %p260 = scmp.eq.s32.totalorder %s23, 3
    %p261 = por %p259, %p260
    %p263 = scmp.ne.s32.totalorder %s248, %s262
    %p264 = scmp.eq.s32.totalorder %s23, 0
    %p265 = por %p263, %p264
    %s266 = ssub.s32 %s17, %s24
    %p267 = scmp.eq.s32.totalorder %s266, 0
    %s269 = sadd.s32 %s268, 1
    %s270 = scalar_select %p267, %s268, %s269
    %p273 = pneg %p267
    %p274 = scmp.eq.s32.totalorder %s17, 3
    %p275 = por %p273, %p274
    %p276 = scmp.ne.s32.totalorder %s268, %s271
    %p277 = scmp.eq.s32.totalorder %s17, 0
    %p278 = por %p276, %p277
    %p279 = scmp.ne.s32.totalorder %s268, %s271
    %p280 = scmp.eq.s32.totalorder %s22, 3
    %p281 = por %p279, %p280
    %p282 = scmp.ne.s32.totalorder %s271, %s272
    %p283 = scmp.eq.s32.totalorder %s22, 0
    %p284 = por %p282, %p283
    %p285 = scmp.ne.s32.totalorder %s271, %s272
    %p286 = scmp.eq.s32.totalorder %s23, 3
    %p287 = por %p285, %p286
    %p289 = scmp.ne.s32.totalorder %s272, %s288
    %p290 = scmp.eq.s32.totalorder %s23, 0
    %p291 = por %p289, %p290
    %p292 = scmp.le.s32.totalorder 1, %s17
    %p293 = scmp.lt.s32.totalorder %s17, 5
    %p294 = pnand %p292, %p293
    %p295 = pneg %p294
    // Predicated region
    $region9: #{a2c_forward.1} parent=5 // pred_check
      _
    $region10: #{a2c_forward.1} parent=5 // pred_check_branch
      %297 = sbr.rel (%p294) target = $region12
    $region11: #{a2c_forward.1} parent=5 // pred_region
      %s298 = ssub.s32 %s17, 1
      // Predicated region
      $region13: #{a2c_forward.1} parent=11 // pred_check
        %p299 = pneg %p90
      $region14: #{a2c_forward.1} parent=11 // pred_check_branch
        %301 = sbr.rel (%p299) target = $region16
      $region15: #{a2c_forward.1} parent=11 // pred_region
        _
      $region16: #{a2c_forward.1} parent=11 // pred_fallthru
        _
      // Predicated region
      $region17: #{a2c_forward.1} parent=11 // pred_check
        %p302 = pneg %p111
      $region18: #{a2c_forward.1} parent=11 // pred_check_branch
        %304 = sbr.rel (%p302) target = $region20
      $region19: #{a2c_forward.1} parent=11 // pred_region
        _
      $region20: #{a2c_forward.1} parent=11 // pred_fallthru
        _
      // Predicated region
      $region21: #{a2c_forward.1} parent=11 // pred_check
        %p305 = pneg %p132
      $region22: #{a2c_forward.1} parent=11 // pred_check_branch
        %307 = sbr.rel (%p305) target = $region24
      $region23: #{a2c_forward.1} parent=11 // pred_region
        _
      $region24: #{a2c_forward.1} parent=11 // pred_fallthru
        _
      // Predicated region
      $region25: #{a2c_forward.1} parent=11 // pred_check
        %p308 = pneg %p153
      $region26: #{a2c_forward.1} parent=11 // pred_check_branch
        %310 = sbr.rel (%p308) target = $region28
      $region27: #{a2c_forward.1} parent=11 // pred_region
        _
      $region28: #{a2c_forward.1} parent=11 // pred_fallthru
        _
      // Predicated region
      $region29: #{a2c_forward.1} parent=11 // pred_check
        %p311 = pneg %p174
      $region30: #{a2c_forward.1} parent=11 // pred_check_branch
        %313 = sbr.rel (%p311) target = $region32
      $region31: #{a2c_forward.1} parent=11 // pred_region
        _
      $region32: #{a2c_forward.1} parent=11 // pred_fallthru
        _
      // Predicated region
      $region33: #{a2c_forward.1} parent=11 // pred_check
        %p314 = pneg %p195
      $region34: #{a2c_forward.1} parent=11 // pred_check_branch
        %316 = sbr.rel (%p314) target = $region36
      $region35: #{a2c_forward.1} parent=11 // pred_region
        _
      $region36: #{a2c_forward.1} parent=11 // pred_fallthru
        _
      // Predicated region
      $region37: #{a2c_forward.1} parent=11 // pred_check
        %p317 = pneg %p216
      $region38: #{a2c_forward.1} parent=11 // pred_check_branch
        %319 = sbr.rel (%p317) target = $region40
      $region39: #{a2c_forward.1} parent=11 // pred_region
        _
      $region40: #{a2c_forward.1} parent=11 // pred_fallthru
        _
      // Predicated region
      $region41: #{a2c_forward.1} parent=11 // pred_check
        %p320 = pneg %p237
      $region42: #{a2c_forward.1} parent=11 // pred_check_branch
        %322 = sbr.rel (%p320) target = $region44
      $region43: #{a2c_forward.1} parent=11 // pred_region
        _
      $region44: #{a2c_forward.1} parent=11 // pred_fallthru
        _
      // Predicated region
      $region45: #{a2c_forward.1} parent=11 // pred_check
        %p323 = pneg %p258
      $region46: #{a2c_forward.1} parent=11 // pred_check_branch
        %325 = sbr.rel (%p323) target = $region48
      $region47: #{a2c_forward.1} parent=11 // pred_region
        _
      $region48: #{a2c_forward.1} parent=11 // pred_fallthru
        _
    $region12: #{a2c_forward.1} parent=5 // pred_fallthru
      _
    %p326 = scmp.lt.s32.totalorder %s17, 4
    // Predicated region
    $region49: #{a2c_forward.1} parent=5 // pred_check
      %p327 = pneg %p326
    $region50: #{a2c_forward.1} parent=5 // pred_check_branch
      %329 = sbr.rel (%p327) target = $region52
    $region51: #{a2c_forward.1} parent=5 // pred_region
      // Predicated region
      $region53: #{a2c_forward.1} parent=51 // pred_check
        %p330 = pneg %p37
      $region54: #{a2c_forward.1} parent=51 // pred_check_branch
        %332 = sbr.rel (%p330) target = $region56
      $region55: #{a2c_forward.1} parent=51 // pred_region
        %p333 = scmp.lt.s32.totalorder %s17, 3
        %s334 = scalar_select %p333, %s17, 3
        %s335 = smul.addr %s334, 2
        %s336 = smul.addr %s335, 8
        %s337 = scalar_lea.vmem %s0, %s336
      $region56: #{a2c_forward.1} parent=51 // pred_fallthru
        _
      // Predicated region
      $region57: #{a2c_forward.1} parent=51 // pred_check
        %p338 = pneg %p63
      $region58: #{a2c_forward.1} parent=51 // pred_check_branch
        %340 = sbr.rel (%p338) target = $region60
      $region59: #{a2c_forward.1} parent=51 // pred_region
        %p341 = scmp.lt.s32.totalorder %s17, 3
        %s342 = scalar_select %p341, %s17, 3
        %s343 = smul.addr %s342, 3
        %s344 = smul.addr %s343, 8
        %s345 = scalar_lea.vmem %s1, %s344
      $region60: #{a2c_forward.1} parent=51 // pred_fallthru
        _
    $region52: #{a2c_forward.1} parent=5 // pred_fallthru
      _
    %p346 = scmp.le.s32.totalorder 1, %s17
    %p347 = scmp.lt.s32.totalorder %s17, 5
    %p348 = pnand %p346, %p347
    %p349 = pneg %p348
    // Predicated region
    $region61: #{a2c_forward.1} parent=5 // pred_check
      _
    $region62: #{a2c_forward.1} parent=5 // pred_check_branch
      %351 = sbr.rel (%p348) target = $region64
    $region63: #{a2c_forward.1} parent=5 // pred_region
      %s352 = ssub.s32 %s17, 1
      %p353 = scmp.lt.s32.totalorder %s22, 3
      %s354 = scalar_select %p353, %s22, 3
      %s355 = smul.addr %s354, 2
      %s356 = smul.addr %s355, 8
      %s357 = scalar_lea.vmem %s0, %s356
      %p358 = pneg %p43
      %p359 = pneg %p40
      %p360 = scmp.lt.s32.totalorder %s22, 3
      %s361 = scalar_select %p360, %s22, 3
      %s362 = smul.addr %s361, 3
      %s363 = smul.addr %s362, 8
      %s364 = scalar_lea.vmem %s1, %s363
      %p365 = pneg %p69
      %p366 = pneg %p66
      %p367 = pneg %p90
      %p368 = pneg %p87
      %p369 = pneg %p111
      %p370 = pneg %p108
      %p371 = pneg %p132
      %p372 = pneg %p129
      %p373 = pneg %p153
      %p374 = pneg %p150
      %p375 = pneg %p174
      %p376 = pneg %p171
      %p377 = pneg %p195
      %p378 = pneg %p192
      %p379 = pneg %p216
      %p380 = pneg %p213
      %p381 = pneg %p237
      %p382 = pneg %p234
      %p383 = pneg %p258
      %p384 = pneg %p255
      %p385 = pneg %p284
      %p386 = pneg %p281
      %p387 = scmp.lt.s32.totalorder %s22, 3
      %s388 = scalar_select %p387, %s22, 3
      %s389 = smul.addr %s388, 2
      %s390 = smul.addr %s389, 8
      %s391 = scalar_lea.vmem %s11, %s390
      %p392 = scmp.lt.s32.totalorder %s22, 3
      %s393 = scalar_select %p392, %s22, 3
      %s394 = smul.addr %s393, 2
      %s395 = smul.addr %s394, 8
      %s396 = scalar_lea.vmem %s0, %s395
      %p397 = scmp.lt.s32.totalorder %s22, 3
      %s398 = scalar_select %p397, %s22, 3
      %s399 = smul.addr %s398, 3
      %s400 = smul.addr %s399, 8
      %s401 = scalar_lea.vmem %s1, %s400
      %p402 = scmp.lt.s32.totalorder %s22, 3
      %s403 = scalar_select %p402, %s22, 3
      %s404 = smul.addr %s403, 2
      %s405 = smul.addr %s404, 8
      %s406 = scalar_lea.vmem %s11, %s405
      %v407 = vld [vmem:[%s396] sm:$0xff]
      %v408 = vld [vmem:[%s396 + $0x8] sm:$0xff]
      %v409 = vld [vmem:[%s401] sm:$0xff]
      %v410 = vld [vmem:[%s401 + $0x8] sm:$0xff]
      %v411 = vld [vmem:[%s401 + $0x10] sm:$0xff]
      %v412 = vlaneseq
      %v413 = vand.u32 %v412, 127
      %v414 = vld [vmem:[%s2] sm:$0xff]
      %v415 = vld [vmem:[%s2 + $0x8] sm:$0xff]
      %v416 = vld [vmem:[%s2 + $0x10] sm:$0xff]
      %417 = vset.pattern.permute.xlu0 0
      %418 = vperm.xlu0 %417, %v414
      %v419 = vpop.permute.xlu0 %418
      %420 = vset.pattern.permute.xlu0 0
      %421 = vperm.xlu0 %420, %v415
      %v422 = vpop.permute.xlu0 %421
      %423 = vset.pattern.permute.xlu0 0
      %424 = vperm.xlu0 %423, %v416
      %v425 = vpop.permute.xlu0 %424
      %vm426 = vcmp.eq.s32.totalorder %v419, %v413
      %vm427 = vcmp.eq.s32.totalorder %v422, %v413
      %vm428 = vcmp.eq.s32.totalorder %v425, %v413
      %v429 = vsel %vm426, 1, 0
      %v430 = vsel %vm427, 1, 0
      %v431 = vsel %vm428, 1, 0
      %v432 = vcvt.s32.f32 %v429
      %v433 = vcvt.s32.f32 %v430
      %v434 = vcvt.s32.f32 %v431
      %v435 = vld [vmem:[%s3] sm:$0xff]
      %v436 = vld [vmem:[%s3 + $0x8] sm:$0xff]
      %v437 = vld [vmem:[%s3 + $0x10] sm:$0xff]
      %438 = vset.pattern.permute.xlu0 0
      %439 = vperm.xlu0 %438, %v435
      %v440 = vpop.permute.xlu0 %439
      %441 = vset.pattern.permute.xlu0 0
      %442 = vperm.xlu0 %441, %v436
      %v443 = vpop.permute.xlu0 %442
      %444 = vset.pattern.permute.xlu0 0
      %445 = vperm.xlu0 %444, %v437
      %v446 = vpop.permute.xlu0 %445
      %vm447 = vcmp.eq.s32.totalorder %v440, %v413
      %vm448 = vcmp.eq.s32.totalorder %v443, %v413
      %vm449 = vcmp.eq.s32.totalorder %v446, %v413
      %v450 = vsel %vm447, 1, 0
      %v451 = vsel %vm448, 1, 0
      %v452 = vsel %vm449, 1, 0
      %v453 = vcvt.s32.f32 %v450
      %v454 = vcvt.s32.f32 %v451
      %v455 = vcvt.s32.f32 %v452
      %vm456 = vcmask 130048
      %v458 = vsel %vm456, %v432, 0
      %v461 = vsel %vm456, %v433, 0
      %v464 = vsel %vm456, %v434, 0
      %466 = vmatprep.subr.mxu0 0.0
      %467 = vmatpush1.msra.mxu0 %v407
      %468 = vmatprep.subr.mxu0 0.0
      %469 = vmatpush1.msra.mxu0 %v408
      %470 = vmatprep.subr.mxu0 0.0
      %471 = vmatpush1.msra.mxu0 0.0
      %472 = vmatprep.subr.mxu0 0.0
      %473 = vmatpush1.msra.mxu0 0.0
      %474 = vmatprep.subr.mxu0 0.0
      %475 = vmatpush1.msra.mxu0 0.0
      %476 = vmatprep.subr.mxu0 0.0
      %477 = vmatpush1.msra.mxu0 0.0
      %478 = vmatprep.subr.mxu0 0.0
      %479 = vmatpush1.msra.mxu0 0.0
      %480 = vmatprep.subr.mxu0 0.0
      %481 = vmatpush1.msra.mxu0 0.0
      %482 = vmatprep.subr.mxu0 0.0
      %483 = vmatpush1.msra.mxu0 0.0
      %484 = vmatprep.subr.mxu0 0.0
      %485 = vmatpush1.msra.mxu0 0.0
      %486 = vmatprep.subr.mxu0 0.0
      %487 = vmatpush1.msra.mxu0 0.0
      %488 = vmatprep.subr.mxu0 0.0
      %489 = vmatpush1.msra.mxu0 0.0
      %490 = vmatprep.subr.mxu0 0.0
      %491 = vmatpush1.msra.mxu0 0.0
      %492 = vmatprep.subr.mxu0 0.0
      %493 = vmatpush1.msra.mxu0 0.0
      %494 = vmatprep.subr.mxu0 0.0
      %495 = vmatpush1.msra.mxu0 0.0
      %496 = vmatprep.subr.mxu0 0.0
      %497 = vmatpush1.msra.mxu0 0.0
      %498 = vmatprep.subr.mxu0 0.0
      %499 = vmatpush1.msra.mxu0 0.0
      %500 = vmatprep.subr.mxu0 0.0
      %501 = vmatpush1.msra.mxu0 0.0
      %502 = vmatprep.subr.mxu0 0.0
      %503 = vmatpush1.msra.mxu0 0.0
      %504 = vmatprep.subr.mxu0 0.0
      %505 = vmatpush1.msra.mxu0 0.0
      %506 = vmatprep.subr.mxu0 0.0
      %507 = vmatpush1.msra.mxu0 0.0
      %508 = vmatprep.subr.mxu0 0.0
      %509 = vmatpush1.msra.mxu0 0.0
      %510 = vmatprep.subr.mxu0 0.0
      %511 = vmatpush1.msra.mxu0 0.0
      %512 = vmatprep.subr.mxu0 0.0
      %513 = vmatpush1.msra.mxu0 0.0
      %514 = vmatprep.subr.mxu0 0.0
      %515 = vmatpush1.msra.mxu0 0.0
      %516 = vmatprep.subr.mxu0 0.0
      %517 = vmatpush1.msra.mxu0 0.0
      %518 = vmatprep.subr.mxu0 0.0
      %519 = vmatpush1.msra.mxu0 0.0
      %520 = vmatprep.subr.mxu0 0.0
      %521 = vmatpush1.msra.mxu0 0.0
      %522 = vmatprep.subr.mxu0 0.0
      %523 = vmatpush1.msra.mxu0 0.0
      %524 = vmatprep.subr.mxu0 0.0
      %525 = vmatpush1.msra.mxu0 0.0
      %526 = vmatprep.subr.mxu0 0.0
      %527 = vmatpush1.msra.mxu0 0.0
      %528 = vmatprep.subr.mxu0 0.0
      %529 = vmatpush1.msra.mxu0 0.0
      %530 = vmatprep.mubr.f32.mxu0 0.0
      %531 = vmatmul.mubr.f32.gmra.mrb[0].mxu0 %v458
      %v532 = vpop.f32.mrb[0].mxu0
      %v533 = vadd.f32 0.0, %v532
      %v534 = vpop.f32.mrb[0].mxu0
      %535 = vmatprep.mubr.f32.mxu0 0.0
      %536 = vmatmul.mubr.f32.gmra.mrb[0].mxu0 %v461
      %v537 = vpop.f32.mrb[0].mxu0
      %v538 = vadd.f32 0.0, %v537
      %v539 = vpop.f32.mrb[0].mxu0
      %540 = vmatprep.mubr.f32.mxu0 0.0
      %541 = vmatmul.mubr.f32.gmra.mrb[0].mxu0 %v464
      %v542 = vpop.f32.mrb[0].mxu0
      %v543 = vadd.f32 0.0, %v542
      %v544 = vpop.f32.mrb[0].mxu0
      %545 = vdwg.mxu0
      %v547 = vsel %vm456, %v453, 0
      %v550 = vsel %vm456, %v454, 0
      %v553 = vsel %vm456, %v455, 0
      %555 = vmatprep.subr.mxu0 0.0
      %556 = vmatpush1.msra.mxu0 %v407
      %557 = vmatprep.subr.mxu0 0.0
      %558 = vmatpush1.msra.mxu0 %v408
      %559 = vmatprep.subr.mxu0 0.0
      %560 = vmatpush1.msra.mxu0 0.0
      %561 = vmatprep.subr.mxu0 0.0
      %562 = vmatpush1.msra.mxu0 0.0
      %563 = vmatprep.subr.mxu0 0.0
      %564 = vmatpush1.msra.mxu0 0.0
      %565 = vmatprep.subr.mxu0 0.0
      %566 = vmatpush1.msra.mxu0 0.0
      %567 = vmatprep.subr.mxu0 0.0
      %568 = vmatpush1.msra.mxu0 0.0
      %569 = vmatprep.subr.mxu0 0.0
      %570 = vmatpush1.msra.mxu0 0.0
      %571 = vmatprep.subr.mxu0 0.0
      %572 = vmatpush1.msra.mxu0 0.0
      %573 = vmatprep.subr.mxu0 0.0
      %574 = vmatpush1.msra.mxu0 0.0
      %575 = vmatprep.subr.mxu0 0.0
      %576 = vmatpush1.msra.mxu0 0.0
      %577 = vmatprep.subr.mxu0 0.0
      %578 = vmatpush1.msra.mxu0 0.0
      %579 = vmatprep.subr.mxu0 0.0
      %580 = vmatpush1.msra.mxu0 0.0
      %581 = vmatprep.subr.mxu0 0.0
      %582 = vmatpush1.msra.mxu0 0.0
      %583 = vmatprep.subr.mxu0 0.0
      %584 = vmatpush1.msra.mxu0 0.0
      %585 = vmatprep.subr.mxu0 0.0
      %586 = vmatpush1.msra.mxu0 0.0
      %587 = vmatprep.subr.mxu0 0.0
      %588 = vmatpush1.msra.mxu0 0.0
      %589 = vmatprep.subr.mxu0 0.0
      %590 = vmatpush1.msra.mxu0 0.0
      %591 = vmatprep.subr.mxu0 0.0
      %592 = vmatpush1.msra.mxu0 0.0
      %593 = vmatprep.subr.mxu0 0.0
      %594 = vmatpush1.msra.mxu0 0.0
      %595 = vmatprep.subr.mxu0 0.0
      %596 = vmatpush1.msra.mxu0 0.0
      %597 = vmatprep.subr.mxu0 0.0
      %598 = vmatpush1.msra.mxu0 0.0
      %599 = vmatprep.subr.mxu0 0.0
      %600 = vmatpush1.msra.mxu0 0.0
      %601 = vmatprep.subr.mxu0 0.0
      %602 = vmatpush1.msra.mxu0 0.0
      %603 = vmatprep.subr.mxu0 0.0
      %604 = vmatpush1.msra.mxu0 0.0
      %605 = vmatprep.subr.mxu0 0.0
      %606 = vmatpush1.msra.mxu0 0.0
      %607 = vmatprep.subr.mxu0 0.0
      %608 = vmatpush1.msra.mxu0 0.0
      %609 = vmatprep.subr.mxu0 0.0
      %610 = vmatpush1.msra.mxu0 0.0
      %611 = vmatprep.subr.mxu0 0.0
      %612 = vmatpush1.msra.mxu0 0.0
      %613 = vmatprep.subr.mxu0 0.0
      %614 = vmatpush1.msra.mxu0 0.0
      %615 = vmatprep.subr.mxu0 0.0
      %616 = vmatpush1.msra.mxu0 0.0
      %617 = vmatprep.subr.mxu0 0.0
      %618 = vmatpush1.msra.mxu0 0.0
      %619 = vmatprep.mubr.f32.mxu0 0.0
      %620 = vmatmul.mubr.f32.gmra.mrb[0].mxu0 %v547
      %v621 = vpop.f32.mrb[0].mxu0
      %v622 = vadd.f32 0.0, %v621
      %v623 = vpop.f32.mrb[0].mxu0
      %624 = vmatprep.mubr.f32.mxu0 0.0
      %625 = vmatmul.mubr.f32.gmra.mrb[0].mxu0 %v550
      %v626 = vpop.f32.mrb[0].mxu0
      %v627 = vadd.f32 0.0, %v626
      %v628 = vpop.f32.mrb[0].mxu0
      %629 = vmatprep.mubr.f32.mxu0 0.0
      %630 = vmatmul.mubr.f32.gmra.mrb[0].mxu0 %v553
      %v631 = vpop.f32.mrb[0].mxu0
      %v632 = vadd.f32 0.0, %v631
      %v633 = vpop.f32.mrb[0].mxu0
      %634 = vdwg.mxu0
      %v635 = vld [vmem:[%s4] sm:$0xff]
      %v636 = vld [vmem:[%s4 + $0x8] sm:$0xff]
      %v637 = vld [vmem:[%s4 + $0x10] sm:$0x3f]
      %s638 = scalar_lea.vmem %s4, 24
      %v639 = vld [vmem:[%s638] sm:$0xff]
      %v640 = vld [vmem:[%s638 + $0x8] sm:$0xff]
      %v641 = vld [vmem:[%s638 + $0x10] sm:$0x3f]
      %vm642 = vcmask 179200
      %v644 = vsel %vm642, %v622, 0
      %v647 = vsel %vm642, %v627, 0
      %v650 = vsel %vm642, %v632, 0
      %vm652 = vcmask 1045504
      %v654 = vsel %vm652, %v641, 0
      %656 = vmatprep.subr.mxu0 0.0
      %657 = vmatpush1.msra.mxu0 %v639
      %658 = vmatprep.subr.mxu0 0.0
      %659 = vmatpush1.msra.mxu0 %v640
      %660 = vmatprep.subr.mxu0 0.0
      %661 = vmatpush1.msra.mxu0 %v654
      %662 = vmatprep.subr.mxu0 0.0
      %663 = vmatpush1.msra.mxu0 0.0
      %664 = vmatprep.subr.mxu0 0.0
      %665 = vmatpush1.msra.mxu0 0.0
      %666 = vmatprep.subr.mxu0 0.0
      %667 = vmatpush1.msra.mxu0 0.0
      %668 = vmatprep.subr.mxu0 0.0
      %669 = vmatpush1.msra.mxu0 0.0
      %670 = vmatprep.subr.mxu0 0.0
      %671 = vmatpush1.msra.mxu0 0.0
      %672 = vmatprep.subr.mxu0 0.0
      %673 = vmatpush1.msra.mxu0 0.0
      %674 = vmatprep.subr.mxu0 0.0
      %675 = vmatpush1.msra.mxu0 0.0
      %676 = vmatprep.subr.mxu0 0.0
      %677 = vmatpush1.msra.mxu0 0.0
      %678 = vmatprep.subr.mxu0 0.0
      %679 = vmatpush1.msra.mxu0 0.0
      %680 = vmatprep.subr.mxu0 0.0
      %681 = vmatpush1.msra.mxu0 0.0
      %682 = vmatprep.subr.mxu0 0.0
      %683 = vmatpush1.msra.mxu0 0.0
      %684 = vmatprep.subr.mxu0 0.0
      %685 = vmatpush1.msra.mxu0 0.0
      %686 = vmatprep.subr.mxu0 0.0
      %687 = vmatpush1.msra.mxu0 0.0
      %688 = vmatprep.subr.mxu0 0.0
      %689 = vmatpush1.msra.mxu0 0.0
      %690 = vmatprep.subr.mxu0 0.0
      %691 = vmatpush1.msra.mxu0 0.0
      %692 = vmatprep.subr.mxu0 0.0
      %693 = vmatpush1.msra.mxu0 0.0
      %694 = vmatprep.subr.mxu0 0.0
      %695 = vmatpush1.msra.mxu0 0.0
      %696 = vmatprep.subr.mxu0 0.0
      %697 = vmatpush1.msra.mxu0 0.0
      %698 = vmatprep.subr.mxu0 0.0
      %699 = vmatpush1.msra.mxu0 0.0
      %700 = vmatprep.subr.mxu0 0.0
      %701 = vmatpush1.msra.mxu0 0.0
      %702 = vmatprep.subr.mxu0 0.0
      %703 = vmatpush1.msra.mxu0 0.0
      %704 = vmatprep.subr.mxu0 0.0
      %705 = vmatpush1.msra.mxu0 0.0
      %706 = vmatprep.subr.mxu0 0.0
      %707 = vmatpush1.msra.mxu0 0.0
      %708 = vmatprep.subr.mxu0 0.0
      %709 = vmatpush1.msra.mxu0 0.0
      %710 = vmatprep.subr.mxu0 0.0
      %711 = vmatpush1.msra.mxu0 0.0
      %712 = vmatprep.subr.mxu0 0.0
      %713 = vmatpush1.msra.mxu0 0.0
      %714 = vmatprep.subr.mxu0 0.0
      %715 = vmatpush1.msra.mxu0 0.0
      %716 = vmatprep.subr.mxu0 0.0
      %717 = vmatpush1.msra.mxu0 0.0
      %718 = vmatprep.subr.mxu0 0.0
      %719 = vmatpush1.msra.mxu0 0.0
      %720 = vmatprep.mubr.f32.mxu0 0.0
      %721 = vmatmul.mubr.f32.gmra.mrb[0].mxu0 %v644
      %v722 = vpop.f32.mrb[0].mxu0
      %v723 = vadd.f32 0.0, %v722
      %v724 = vpop.f32.mrb[0].mxu0
      %725 = vmatprep.mubr.f32.mxu0 0.0
      %726 = vmatmul.mubr.f32.gmra.mrb[0].mxu0 %v647
      %v727 = vpop.f32.mrb[0].mxu0
      %v728 = vadd.f32 0.0, %v727
      %v729 = vpop.f32.mrb[0].mxu0
      %730 = vmatprep.mubr.f32.mxu0 0.0
      %731 = vmatmul.mubr.f32.gmra.mrb[0].mxu0 %v650
      %v732 = vpop.f32.mrb[0].mxu0
      %v733 = vadd.f32 0.0, %v732
      %v734 = vpop.f32.mrb[0].mxu0
      %735 = vdwg.mxu0
      %v737 = vsel %vm642, %v533, 0
      %v740 = vsel %vm642, %v538, 0
      %v743 = vsel %vm642, %v543, 0
      %v746 = vsel %vm652, %v637, 0
      %748 = vmatprep.subr.mxu0 0.0
      %749 = vmatpush1.msra.mxu0 %v635
      %750 = vmatprep.subr.mxu0 0.0
      %751 = vmatpush1.msra.mxu0 %v636
      %752 = vmatprep.subr.mxu0 0.0
      %753 = vmatpush1.msra.mxu0 %v746
      %754 = vmatprep.subr.mxu0 0.0
      %755 = vmatpush1.msra.mxu0 0.0
      %756 = vmatprep.subr.mxu0 0.0
      %757 = vmatpush1.msra.mxu0 0.0
      %758 = vmatprep.subr.mxu0 0.0
      %759 = vmatpush1.msra.mxu0 0.0
      %760 = vmatprep.subr.mxu0 0.0
      %761 = vmatpush1.msra.mxu0 0.0
      %762 = vmatprep.subr.mxu0 0.0
      %763 = vmatpush1.msra.mxu0 0.0
      %764 = vmatprep.subr.mxu0 0.0
      %765 = vmatpush1.msra.mxu0 0.0
      %766 = vmatprep.subr.mxu0 0.0
      %767 = vmatpush1.msra.mxu0 0.0
      %768 = vmatprep.subr.mxu0 0.0
      %769 = vmatpush1.msra.mxu0 0.0
      %770 = vmatprep.subr.mxu0 0.0
      %771 = vmatpush1.msra.mxu0 0.0
      %772 = vmatprep.subr.mxu0 0.0
      %773 = vmatpush1.msra.mxu0 0.0
      %774 = vmatprep.subr.mxu0 0.0
      %775 = vmatpush1.msra.mxu0 0.0
      %776 = vmatprep.subr.mxu0 0.0
      %777 = vmatpush1.msra.mxu0 0.0
      %778 = vmatprep.subr.mxu0 0.0
      %779 = vmatpush1.msra.mxu0 0.0
      %780 = vmatprep.subr.mxu0 0.0
      %781 = vmatpush1.msra.mxu0 0.0
      %782 = vmatprep.subr.mxu0 0.0
      %783 = vmatpush1.msra.mxu0 0.0
      %784 = vmatprep.subr.mxu0 0.0
      %785 = vmatpush1.msra.mxu0 0.0
      %786 = vmatprep.subr.mxu0 0.0
      %787 = vmatpush1.msra.mxu0 0.0
      %788 = vmatprep.subr.mxu0 0.0
      %789 = vmatpush1.msra.mxu0 0.0
      %790 = vmatprep.subr.mxu0 0.0
      %791 = vmatpush1.msra.mxu0 0.0
      %792 = vmatprep.subr.mxu0 0.0
      %793 = vmatpush1.msra.mxu0 0.0
      %794 = vmatprep.subr.mxu0 0.0
      %795 = vmatpush1.msra.mxu0 0.0
      %796 = vmatprep.subr.mxu0 0.0
      %797 = vmatpush1.msra.mxu0 0.0
      %798 = vmatprep.subr.mxu0 0.0
      %799 = vmatpush1.msra.mxu0 0.0
      %800 = vmatprep.subr.mxu0 0.0
      %801 = vmatpush1.msra.mxu0 0.0
      %802 = vmatprep.subr.mxu0 0.0
      %803 = vmatpush1.msra.mxu0 0.0
      %804 = vmatprep.subr.mxu0 0.0
      %805 = vmatpush1.msra.mxu0 0.0
      %806 = vmatprep.subr.mxu0 0.0
      %807 = vmatpush1.msra.mxu0 0.0
      %808 = vmatprep.subr.mxu0 0.0
      %809 = vmatpush1.msra.mxu0 0.0
      %810 = vmatprep.subr.mxu0 0.0
      %811 = vmatpush1.msra.mxu0 0.0
      %812 = vmatprep.mubr.f32.mxu0 0.0
      %813 = vmatmul.mubr.f32.gmra.mrb[0].mxu0 %v737
      %v814 = vpop.f32.mrb[0].mxu0
      %v815 = vadd.f32 %v723, %v814
      %v816 = vpop.f32.mrb[0].mxu0
      %817 = vmatprep.mubr.f32.mxu0 0.0
      %818 = vmatmul.mubr.f32.gmra.mrb[0].mxu0 %v740
      %v819 = vpop.f32.mrb[0].mxu0
      %v820 = vadd.f32 %v728, %v819
      %v821 = vpop.f32.mrb[0].mxu0
      %822 = vmatprep.mubr.f32.mxu0 0.0
      %823 = vmatmul.mubr.f32.gmra.mrb[0].mxu0 %v743
      %v824 = vpop.f32.mrb[0].mxu0
      %v825 = vadd.f32 %v733, %v824
      %v826 = vpop.f32.mrb[0].mxu0
      %827 = vdwg.mxu0
      %s828 = scalar_lea.vmem %s4, 48
      %v829 = vld [vmem:[%s828] sm:$0xff]
      %v830 = vld [vmem:[%s828 + $0x8] sm:$0xff]
      %v831 = vld [vmem:[%s828 + $0x10] sm:$0x3f]
      %v833 = vsel %vm642, %v409, 0
      %v836 = vsel %vm642, %v410, 0
      %v839 = vsel %vm642, %v411, 0
      %v842 = vsel %vm652, %v831, 0
      %844 = vmatprep.subr.mxu0 0.0
      %845 = vmatpush1.msra.mxu0 %v829
      %846 = vmatprep.subr.mxu0 0.0
      %847 = vmatpush1.msra.mxu0 %v830
      %848 = vmatprep.subr.mxu0 0.0
      %849 = vmatpush1.msra.mxu0 %v842
      %850 = vmatprep.subr.mxu0 0.0
      %851 = vmatpush1.msra.mxu0 0.0
      %852 = vmatprep.subr.mxu0 0.0
      %853 = vmatpush1.msra.mxu0 0.0
      %854 = vmatprep.subr.mxu0 0.0
      %855 = vmatpush1.msra.mxu0 0.0
      %856 = vmatprep.subr.mxu0 0.0
      %857 = vmatpush1.msra.mxu0 0.0
      %858 = vmatprep.subr.mxu0 0.0
      %859 = vmatpush1.msra.mxu0 0.0
      %860 = vmatprep.subr.mxu0 0.0
      %861 = vmatpush1.msra.mxu0 0.0
      %862 = vmatprep.subr.mxu0 0.0
      %863 = vmatpush1.msra.mxu0 0.0
      %864 = vmatprep.subr.mxu0 0.0
      %865 = vmatpush1.msra.mxu0 0.0
      %866 = vmatprep.subr.mxu0 0.0
      %867 = vmatpush1.msra.mxu0 0.0
      %868 = vmatprep.subr.mxu0 0.0
      %869 = vmatpush1.msra.mxu0 0.0
      %870 = vmatprep.subr.mxu0 0.0
      %871 = vmatpush1.msra.mxu0 0.0
      %872 = vmatprep.subr.mxu0 0.0
      %873 = vmatpush1.msra.mxu0 0.0
      %874 = vmatprep.subr.mxu0 0.0
      %875 = vmatpush1.msra.mxu0 0.0
      %876 = vmatprep.subr.mxu0 0.0
      %877 = vmatpush1.msra.mxu0 0.0
      %878 = vmatprep.subr.mxu0 0.0
      %879 = vmatpush1.msra.mxu0 0.0
      %880 = vmatprep.subr.mxu0 0.0
      %881 = vmatpush1.msra.mxu0 0.0
      %882 = vmatprep.subr.mxu0 0.0
      %883 = vmatpush1.msra.mxu0 0.0
      %884 = vmatprep.subr.mxu0 0.0
      %885 = vmatpush1.msra.mxu0 0.0
      %886 = vmatprep.subr.mxu0 0.0
      %887 = vmatpush1.msra.mxu0 0.0
      %888 = vmatprep.subr.mxu0 0.0
      %889 = vmatpush1.msra.mxu0 0.0
      %890 = vmatprep.subr.mxu0 0.0
      %891 = vmatpush1.msra.mxu0 0.0
      %892 = vmatprep.subr.mxu0 0.0
      %893 = vmatpush1.msra.mxu0 0.0
      %894 = vmatprep.subr.mxu0 0.0
      %895 = vmatpush1.msra.mxu0 0.0
      %896 = vmatprep.subr.mxu0 0.0
      %897 = vmatpush1.msra.mxu0 0.0
      %898 = vmatprep.subr.mxu0 0.0
      %899 = vmatpush1.msra.mxu0 0.0
      %900 = vmatprep.subr.mxu0 0.0
      %901 = vmatpush1.msra.mxu0 0.0
      %902 = vmatprep.subr.mxu0 0.0
      %903 = vmatpush1.msra.mxu0 0.0
      %904 = vmatprep.subr.mxu0 0.0
      %905 = vmatpush1.msra.mxu0 0.0
      %906 = vmatprep.subr.mxu0 0.0
      %907 = vmatpush1.msra.mxu0 0.0
      %908 = vmatprep.mubr.f32.mxu0 0.0
      %909 = vmatmul.mubr.f32.gmra.mrb[0].mxu0 %v833
      %v910 = vpop.f32.mrb[0].mxu0
      %v911 = vadd.f32 0.0, %v910
      %v912 = vpop.f32.mrb[0].mxu0
      %913 = vmatprep.mubr.f32.mxu0 0.0
      %914 = vmatmul.mubr.f32.gmra.mrb[0].mxu0 %v836
      %v915 = vpop.f32.mrb[0].mxu0
      %v916 = vadd.f32 0.0, %v915
      %v917 = vpop.f32.mrb[0].mxu0
      %918 = vmatprep.mubr.f32.mxu0 0.0
      %919 = vmatmul.mubr.f32.gmra.mrb[0].mxu0 %v839
      %v920 = vpop.f32.mrb[0].mxu0
      %v921 = vadd.f32 0.0, %v920
      %v922 = vpop.f32.mrb[0].mxu0
      %923 = vdwg.mxu0
      %v924 = vadd.f32 %v815, %v911
      %v925 = vadd.f32 %v820, %v916
      %v926 = vadd.f32 %v825, %v921
      %v927 = vld [vmem:[%s5] sm:$0x1]
      %v929 = vlaneseq
      %v930 = vshrl.u32 %v929, 7
      %v931 = vsub.s32 0, %v930
      %v932 = vrot.slane %v927, %v931
      %v934 = vadd.f32 %v924, %v932
      %v935 = vadd.f32 %v925, %v932
      %v936 = vadd.f32 %v926, %v932
      %v937 = vmax.f32 %v934, 0.0
      %v938 = vmax.f32 %v935, 0.0
      %v939 = vmax.f32 %v936, 0.0
      %v940 = vld [vmem:[%s6] sm:$0xff]
      %v941 = vld [vmem:[%s6 + $0x8] sm:$0xff]
      %v942 = vld [vmem:[%s6 + $0x10] sm:$0xff]
      %v943 = vld [vmem:[%s6 + $0x18] sm:$0xff]
      %v944 = vld [vmem:[%s6 + $0x20] sm:$0xff]
      %v945 = vld [vmem:[%s6 + $0x28] sm:$0xff]
      %v946 = vld [vmem:[%s6 + $0x30] sm:$0xff]
      %v947 = vld [vmem:[%s6 + $0x38] sm:$0xff]
      %v948 = vld [vmem:[%s7] sm:$0x1]
      %v950 = vlaneseq
      %v951 = vshrl.u32 %v950, 7
      %v952 = vsub.s32 0, %v951
      %v953 = vrot.slane %v948, %v952
      %vm955 = vcmask 523264
      %v957 = vsel %vm955, %v937, 0
      %v960 = vsel %vm955, %v938, 0
      %v963 = vsel %vm955, %v939, 0
      %965 = vmatprep.subr.mxu0 0.0
      %966 = vmatpush1.msra.mxu0 %v940
      %967 = vmatprep.subr.mxu0 0.0
      %968 = vmatpush1.msra.mxu0 %v941
      %969 = vmatprep.subr.mxu0 0.0
      %970 = vmatpush1.msra.mxu0 %v942
      %971 = vmatprep.subr.mxu0 0.0
      %972 = vmatpush1.msra.mxu0 %v943
      %973 = vmatprep.subr.mxu0 0.0
      %974 = vmatpush1.msra.mxu0 %v944
      %975 = vmatprep.subr.mxu0 0.0
      %976 = vmatpush1.msra.mxu0 %v945
      %977 = vmatprep.subr.mxu0 0.0
      %978 = vmatpush1.msra.mxu0 %v946
      %979 = vmatprep.subr.mxu0 0.0
      %980 = vmatpush1.msra.mxu0 %v947
      %981 = vmatprep.subr.mxu0 0.0
      %982 = vmatpush1.msra.mxu0 0.0
      %983 = vmatprep.subr.mxu0 0.0
      %984 = vmatpush1.msra.mxu0 0.0
      %985 = vmatprep.subr.mxu0 0.0
      %986 = vmatpush1.msra.mxu0 0.0
      %987 = vmatprep.subr.mxu0 0.0
      %988 = vmatpush1.msra.mxu0 0.0
      %989 = vmatprep.subr.mxu0 0.0
      %990 = vmatpush1.msra.mxu0 0.0
      %991 = vmatprep.subr.mxu0 0.0
      %992 = vmatpush1.msra.mxu0 0.0
      %993 = vmatprep.subr.mxu0 0.0
      %994 = vmatpush1.msra.mxu0 0.0
      %995 = vmatprep.subr.mxu0 0.0
      %996 = vmatpush1.msra.mxu0 0.0
      %997 = vmatprep.subr.mxu0 0.0
      %998 = vmatpush1.msra.mxu0 0.0
      %999 = vmatprep.subr.mxu0 0.0
      %1000 = vmatpush1.msra.mxu0 0.0
      %1001 = vmatprep.subr.mxu0 0.0
      %1002 = vmatpush1.msra.mxu0 0.0
      %1003 = vmatprep.subr.mxu0 0.0
      %1004 = vmatpush1.msra.mxu0 0.0
      %1005 = vmatprep.subr.mxu0 0.0
      %1006 = vmatpush1.msra.mxu0 0.0
      %1007 = vmatprep.subr.mxu0 0.0
      %1008 = vmatpush1.msra.mxu0 0.0
      %1009 = vmatprep.subr.mxu0 0.0
      %1010 = vmatpush1.msra.mxu0 0.0
      %1011 = vmatprep.subr.mxu0 0.0
      %1012 = vmatpush1.msra.mxu0 0.0
      %1013 = vmatprep.subr.mxu0 0.0
      %1014 = vmatpush1.msra.mxu0 0.0
      %1015 = vmatprep.subr.mxu0 0.0
      %1016 = vmatpush1.msra.mxu0 0.0
      %1017 = vmatprep.subr.mxu0 0.0
      %1018 = vmatpush1.msra.mxu0 0.0
      %1019 = vmatprep.subr.mxu0 0.0
      %1020 = vmatpush1.msra.mxu0 0.0
      %1021 = vmatprep.subr.mxu0 0.0
      %1022 = vmatpush1.msra.mxu0 0.0
      %1023 = vmatprep.subr.mxu0 0.0
      %1024 = vmatpush1.msra.mxu0 0.0
      %1025 = vmatprep.subr.mxu0 0.0
      %1026 = vmatpush1.msra.mxu0 0.0
      %1027 = vmatprep.subr.mxu0 0.0
      %1028 = vmatpush1.msra.mxu0 0.0
      %1029 = vmatprep.mubr.f32.mxu0 0.0
      %1030 = vmatmul.mubr.f32.gmra.mrb[0].mxu0 %v957
      %v1031 = vpop.f32.mrb[0].mxu0
      %v1032 = vadd.f32 %v953, %v1031
      %v1033 = vpop.f32.mrb[0].mxu0
      %1034 = vmatprep.mubr.f32.mxu0 0.0
      %1035 = vmatmul.mubr.f32.gmra.mrb[0].mxu0 %v960
      %v1036 = vpop.f32.mrb[0].mxu0
      %v1037 = vadd.f32 %v953, %v1036
      %v1038 = vpop.f32.mrb[0].mxu0
      %1039 = vmatprep.mubr.f32.mxu0 0.0
      %1040 = vmatmul.mubr.f32.gmra.mrb[0].mxu0 %v963
      %v1041 = vpop.f32.mrb[0].mxu0
      %v1042 = vadd.f32 %v953, %v1041
      %v1043 = vpop.f32.mrb[0].mxu0
      %1044 = vdwg.mxu0
      %1045 = vxpose.xlu0.b32.start [1/16] %v432, 128
      %1046 = vxpose.xlu0.b32.cont [2/16] %v433, 128
      %1047 = vxpose.xlu0.b32.cont [3/16] %v434, 128
      %1048 = vxpose.xlu0.b32.cont [4/16] 0.0, 128
      %1049 = vxpose.xlu0.b32.cont [5/16] 0.0, 128
      %1050 = vxpose.xlu0.b32.cont [6/16] 0.0, 128
      %1051 = vxpose.xlu0.b32.cont [7/16] 0.0, 128
      %1052 = vxpose.xlu0.b32.cont [8/16] 0.0, 128
      %1053 = vxpose.xlu0.b32.cont [9/16] 0.0, 128
      %1054 = vxpose.xlu0.b32.cont [10/16] 0.0, 128
      %1055 = vxpose.xlu0.b32.cont [11/16] 0.0, 128
      %1056 = vxpose.xlu0.b32.cont [12/16] 0.0, 128
      %1057 = vxpose.xlu0.b32.cont [13/16] 0.0, 128
      %1058 = vxpose.xlu0.b32.cont [14/16] 0.0, 128
      %1059 = vxpose.xlu0.b32.cont [15/16] 0.0, 128
      %1060 = vxpose.xlu0.b32.end [16/16] 0.0, 128
      %v1061 = vpop.trf.xlu0
      %v1062 = vpop.trf.xlu0
      %v1063 = vpop.trf.xlu0
      %v1064 = vpop.trf.xlu0
      %v1065 = vpop.trf.xlu0
      %v1066 = vpop.trf.xlu0
      %v1067 = vpop.trf.xlu0
      %v1068 = vpop.trf.xlu0
      %v1069 = vpop.trf.xlu0
      %v1070 = vpop.trf.xlu0
      %v1071 = vpop.trf.xlu0
      %v1072 = vpop.trf.xlu0
      %v1073 = vpop.trf.xlu0
      %v1074 = vpop.trf.xlu0
      %v1075 = vpop.trf.xlu0
      %v1076 = vpop.trf.xlu0
      %vm1077 = vcmask 195584
      %v1079 = vsel %vm1077, %v1061, 0
      %v1082 = vsel %vm1077, %v1062, 0
      %1084 = vmatprep.subr.mxu0 0.0
      %1085 = vmatpush1.msra.mxu0 %v1032
      %1086 = vmatprep.subr.mxu0 0.0
      %1087 = vmatpush1.msra.mxu0 %v1037
      %1088 = vmatprep.subr.mxu0 0.0
      %1089 = vmatpush1.msra.mxu0 %v1042
      %1090 = vmatprep.subr.mxu0 0.0
      %1091 = vmatpush1.msra.mxu0 0.0
      %1092 = vmatprep.subr.mxu0 0.0
      %1093 = vmatpush1.msra.mxu0 0.0
      %1094 = vmatprep.subr.mxu0 0.0
      %1095 = vmatpush1.msra.mxu0 0.0
      %1096 = vmatprep.subr.mxu0 0.0
      %1097 = vmatpush1.msra.mxu0 0.0
      %1098 = vmatprep.subr.mxu0 0.0
      %1099 = vmatpush1.msra.mxu0 0.0
      %1100 = vmatprep.subr.mxu0 0.0
      %1101 = vmatpush1.msra.mxu0 0.0
      %1102 = vmatprep.subr.mxu0 0.0
      %1103 = vmatpush1.msra.mxu0 0.0
      %1104 = vmatprep.subr.mxu0 0.0
      %1105 = vmatpush1.msra.mxu0 0.0
      %1106 = vmatprep.subr.mxu0 0.0
      %1107 = vmatpush1.msra.mxu0 0.0
      %1108 = vmatprep.subr.mxu0 0.0
      %1109 = vmatpush1.msra.mxu0 0.0
      %1110 = vmatprep.subr.mxu0 0.0
      %1111 = vmatpush1.msra.mxu0 0.0
      %1112 = vmatprep.subr.mxu0 0.0
      %1113 = vmatpush1.msra.mxu0 0.0
      %1114 = vmatprep.subr.mxu0 0.0
      %1115 = vmatpush1.msra.mxu0 0.0
      %1116 = vmatprep.subr.mxu0 0.0
      %1117 = vmatpush1.msra.mxu0 0.0
      %1118 = vmatprep.subr.mxu0 0.0
      %1119 = vmatpush1.msra.mxu0 0.0
      %1120 = vmatprep.subr.mxu0 0.0
      %1121 = vmatpush1.msra.mxu0 0.0
      %1122 = vmatprep.subr.mxu0 0.0
      %1123 = vmatpush1.msra.mxu0 0.0
      %1124 = vmatprep.subr.mxu0 0.0
      %1125 = vmatpush1.msra.mxu0 0.0
      %1126 = vmatprep.subr.mxu0 0.0
      %1127 = vmatpush1.msra.mxu0 0.0
      %1128 = vmatprep.subr.mxu0 0.0
      %1129 = vmatpush1.msra.mxu0 0.0
      %1130 = vmatprep.subr.mxu0 0.0
      %1131 = vmatpush1.msra.mxu0 0.0
      %1132 = vmatprep.subr.mxu0 0.0
      %1133 = vmatpush1.msra.mxu0 0.0
      %1134 = vmatprep.subr.mxu0 0.0
      %1135 = vmatpush1.msra.mxu0 0.0
      %1136 = vmatprep.subr.mxu0 0.0
      %1137 = vmatpush1.msra.mxu0 0.0
      %1138 = vmatprep.subr.mxu0 0.0
      %1139 = vmatpush1.msra.mxu0 0.0
      %1140 = vmatprep.subr.mxu0 0.0
      %1141 = vmatpush1.msra.mxu0 0.0
      %1142 = vmatprep.subr.mxu0 0.0
      %1143 = vmatpush1.msra.mxu0 0.0
      %1144 = vmatprep.subr.mxu0 0.0
      %1145 = vmatpush1.msra.mxu0 0.0
      %1146 = vmatprep.subr.mxu0 0.0
      %1147 = vmatpush1.msra.mxu0 0.0
      %1148 = vmatprep.mubr.f32.mxu0 0.0
      %1149 = vmatmul.mubr.f32.gmra.mrb[0].mxu0 %v1079
      %v1150 = vpop.f32.mrb[0].mxu0
      %v1151 = vadd.f32 0.0, %v1150
      %v1152 = vpop.f32.mrb[0].mxu0
      %1153 = vmatprep.mubr.f32.mxu0 0.0
      %1154 = vmatmul.mubr.f32.gmra.mrb[0].mxu0 %v1082
      %v1155 = vpop.f32.mrb[0].mxu0
      %v1156 = vadd.f32 0.0, %v1155
      %v1157 = vpop.f32.mrb[0].mxu0
      %1158 = vdwg.mxu0
      %v1159 = vld [vmem:[%s8] sm:$0xff]
      %v1160 = vld [vmem:[%s8 + $0x8] sm:$0xff]
      %v1161 = vld [vmem:[%s8 + $0x10] sm:$0x3f]
      %v1162 = vld [vmem:[%s9] sm:$0xff]
      %v1163 = vld [vmem:[%s9 + $0x8] sm:$0xff]
      %v1164 = vld [vmem:[%s9 + $0x10] sm:$0xff]
      %v1165 = vld [vmem:[%s9 + $0x18] sm:$0xff]
      %v1166 = vld [vmem:[%s9 + $0x20] sm:$0xff]
      %v1167 = vld [vmem:[%s9 + $0x28] sm:$0xff]
      %v1168 = vld [vmem:[%s9 + $0x30] sm:$0xff]
      %v1169 = vld [vmem:[%s9 + $0x38] sm:$0xff]
      %v1171 = vsel %vm955, %v1151, 0
      %v1174 = vsel %vm955, %v1156, 0
      %1176 = vmatprep.subr.mxu0 0.0
      %1177 = vmatpush1.msra.mxu0 %v1162
      %1178 = vmatprep.subr.mxu0 0.0
      %1179 = vmatpush1.msra.mxu0 %v1163
      %1180 = vmatprep.subr.mxu0 0.0
      %1181 = vmatpush1.msra.mxu0 %v1164
      %1182 = vmatprep.subr.mxu0 0.0
      %1183 = vmatpush1.msra.mxu0 %v1165
      %1184 = vmatprep.subr.mxu0 0.0
      %1185 = vmatpush1.msra.mxu0 %v1166
      %1186 = vmatprep.subr.mxu0 0.0
      %1187 = vmatpush1.msra.mxu0 %v1167
      %1188 = vmatprep.subr.mxu0 0.0
      %1189 = vmatpush1.msra.mxu0 %v1168
      %1190 = vmatprep.subr.mxu0 0.0
      %1191 = vmatpush1.msra.mxu0 %v1169
      %1192 = vmatprep.subr.mxu0 0.0
      %1193 = vmatpush1.msra.mxu0 0.0
      %1194 = vmatprep.subr.mxu0 0.0
      %1195 = vmatpush1.msra.mxu0 0.0
      %1196 = vmatprep.subr.mxu0 0.0
      %1197 = vmatpush1.msra.mxu0 0.0
      %1198 = vmatprep.subr.mxu0 0.0
      %1199 = vmatpush1.msra.mxu0 0.0
      %1200 = vmatprep.subr.mxu0 0.0
      %1201 = vmatpush1.msra.mxu0 0.0
      %1202 = vmatprep.subr.mxu0 0.0
      %1203 = vmatpush1.msra.mxu0 0.0
      %1204 = vmatprep.subr.mxu0 0.0
      %1205 = vmatpush1.msra.mxu0 0.0
      %1206 = vmatprep.subr.mxu0 0.0
      %1207 = vmatpush1.msra.mxu0 0.0
      %1208 = vmatprep.subr.mxu0 0.0
      %1209 = vmatpush1.msra.mxu0 0.0
      %1210 = vmatprep.subr.mxu0 0.0
      %1211 = vmatpush1.msra.mxu0 0.0
      %1212 = vmatprep.subr.mxu0 0.0
      %1213 = vmatpush1.msra.mxu0 0.0
      %1214 = vmatprep.subr.mxu0 0.0
      %1215 = vmatpush1.msra.mxu0 0.0
      %1216 = vmatprep.subr.mxu0 0.0
      %1217 = vmatpush1.msra.mxu0 0.0
      %1218 = vmatprep.subr.mxu0 0.0
      %1219 = vmatpush1.msra.mxu0 0.0
      %1220 = vmatprep.subr.mxu0 0.0
      %1221 = vmatpush1.msra.mxu0 0.0
      %1222 = vmatprep.subr.mxu0 0.0
      %1223 = vmatpush1.msra.mxu0 0.0
      %1224 = vmatprep.subr.mxu0 0.0
      %1225 = vmatpush1.msra.mxu0 0.0
      %1226 = vmatprep.subr.mxu0 0.0
      %1227 = vmatpush1.msra.mxu0 0.0
      %1228 = vmatprep.subr.mxu0 0.0
      %1229 = vmatpush1.msra.mxu0 0.0
      %1230 = vmatprep.subr.mxu0 0.0
      %1231 = vmatpush1.msra.mxu0 0.0
      %1232 = vmatprep.subr.mxu0 0.0
      %1233 = vmatpush1.msra.mxu0 0.0
      %1234 = vmatprep.subr.mxu0 0.0
      %1235 = vmatpush1.msra.mxu0 0.0
      %1236 = vmatprep.subr.mxu0 0.0
      %1237 = vmatpush1.msra.mxu0 0.0
      %1238 = vmatprep.subr.mxu0 0.0
      %1239 = vmatpush1.msra.mxu0 0.0
      %1240 = vmatprep.mubr.f32.mxu0 0.0
      %1241 = vmatmul.mubr.f32.gmra.mrb[0].mxu0 %v1171
      %v1242 = vpop.f32.mrb[0].mxu0
      %v1243 = vadd.f32 0.0, %v1242
      %v1244 = vpop.f32.mrb[0].mxu0
      %1245 = vmatprep.mubr.f32.mxu0 0.0
      %1246 = vmatmul.mubr.f32.gmra.mrb[0].mxu0 %v1174
      %v1247 = vpop.f32.mrb[0].mxu0
      %v1248 = vadd.f32 0.0, %v1247
      %v1249 = vpop.f32.mrb[0].mxu0
      %1250 = vdwg.mxu0
      %v1252 = vsel %vm642, %v407, 0
      %v1255 = vsel %vm642, %v408, 0
      %v1258 = vsel %vm652, %v1161, 0
      %1260 = vmatprep.subr.mxu0 0.0
      %1261 = vmatpush1.msra.mxu0 %v1159
      %1262 = vmatprep.subr.mxu0 0.0
      %1263 = vmatpush1.msra.mxu0 %v1160
      %1264 = vmatprep.subr.mxu0 0.0
      %1265 = vmatpush1.msra.mxu0 %v1258
      %1266 = vmatprep.subr.mxu0 0.0
      %1267 = vmatpush1.msra.mxu0 0.0
      %1268 = vmatprep.subr.mxu0 0.0
      %1269 = vmatpush1.msra.mxu0 0.0
      %1270 = vmatprep.subr.mxu0 0.0
      %1271 = vmatpush1.msra.mxu0 0.0
      %1272 = vmatprep.subr.mxu0 0.0
      %1273 = vmatpush1.msra.mxu0 0.0
      %1274 = vmatprep.subr.mxu0 0.0
      %1275 = vmatpush1.msra.mxu0 0.0
      %1276 = vmatprep.subr.mxu0 0.0
      %1277 = vmatpush1.msra.mxu0 0.0
      %1278 = vmatprep.subr.mxu0 0.0
      %1279 = vmatpush1.msra.mxu0 0.0
      %1280 = vmatprep.subr.mxu0 0.0
      %1281 = vmatpush1.msra.mxu0 0.0
      %1282 = vmatprep.subr.mxu0 0.0
      %1283 = vmatpush1.msra.mxu0 0.0
      %1284 = vmatprep.subr.mxu0 0.0
      %1285 = vmatpush1.msra.mxu0 0.0
      %1286 = vmatprep.subr.mxu0 0.0
      %1287 = vmatpush1.msra.mxu0 0.0
      %1288 = vmatprep.subr.mxu0 0.0
      %1289 = vmatpush1.msra.mxu0 0.0
      %1290 = vmatprep.subr.mxu0 0.0
      %1291 = vmatpush1.msra.mxu0 0.0
      %1292 = vmatprep.subr.mxu0 0.0
      %1293 = vmatpush1.msra.mxu0 0.0
      %1294 = vmatprep.subr.mxu0 0.0
      %1295 = vmatpush1.msra.mxu0 0.0
      %1296 = vmatprep.subr.mxu0 0.0
      %1297 = vmatpush1.msra.mxu0 0.0
      %1298 = vmatprep.subr.mxu0 0.0
      %1299 = vmatpush1.msra.mxu0 0.0
      %1300 = vmatprep.subr.mxu0 0.0
      %1301 = vmatpush1.msra.mxu0 0.0
      %1302 = vmatprep.subr.mxu0 0.0
      %1303 = vmatpush1.msra.mxu0 0.0
      %1304 = vmatprep.subr.mxu0 0.0
      %1305 = vmatpush1.msra.mxu0 0.0
      %1306 = vmatprep.subr.mxu0 0.0
      %1307 = vmatpush1.msra.mxu0 0.0
      %1308 = vmatprep.subr.mxu0 0.0
      %1309 = vmatpush1.msra.mxu0 0.0
      %1310 = vmatprep.subr.mxu0 0.0
      %1311 = vmatpush1.msra.mxu0 0.0
      %1312 = vmatprep.subr.mxu0 0.0
      %1313 = vmatpush1.msra.mxu0 0.0
      %1314 = vmatprep.subr.mxu0 0.0
      %1315 = vmatpush1.msra.mxu0 0.0
      %1316 = vmatprep.subr.mxu0 0.0
      %1317 = vmatpush1.msra.mxu0 0.0
      %1318 = vmatprep.subr.mxu0 0.0
      %1319 = vmatpush1.msra.mxu0 0.0
      %1320 = vmatprep.subr.mxu0 0.0
      %1321 = vmatpush1.msra.mxu0 0.0
      %1322 = vmatprep.subr.mxu0 0.0
      %1323 = vmatpush1.msra.mxu0 0.0
      %1324 = vmatprep.mubr.f32.mxu0 0.0
      %1325 = vmatmul.mubr.f32.gmra.mrb[0].mxu0 %v1252
      %v1326 = vpop.f32.mrb[0].mxu0
      %v1327 = vadd.f32 %v1243, %v1326
      %v1328 = vpop.f32.mrb[0].mxu0
      %1329 = vmatprep.mubr.f32.mxu0 0.0
      %1330 = vmatmul.mubr.f32.gmra.mrb[0].mxu0 %v1255
      %v1331 = vpop.f32.mrb[0].mxu0
      %v1332 = vadd.f32 %v1248, %v1331
      %v1333 = vpop.f32.mrb[0].mxu0
      %1334 = vdwg.mxu0
      %v1335 = vld [vmem:[%s10] sm:$0x1]
      %v1337 = vlaneseq
      %v1338 = vshrl.u32 %v1337, 7
      %v1339 = vsub.s32 0, %v1338
      %v1340 = vrot.slane %v1335, %v1339
      %v1342 = vadd.f32 %v1327, %v1340
      %v1343 = vadd.f32 %v1332, %v1340
      %v1344 = vmax.f32 %v1342, 0.0
      %v1345 = vmax.f32 %v1343, 0.0
      %v1346 = vand.u32 2147483647, %v1342
      %v1347 = vand.u32 2147483647, %v1343
      %v1348 = vsub.f32 0.0, %v1346
      %v1349 = vsub.f32 0.0, %v1347
      %v1350 = vmul.f32 %v1348, 1.442695
      %v1351 = vpow.pop %v1350
      %v1352 = vmul.f32 %v1349, 1.442695
      %v1353 = vpow.pop %v1352
      %v1354 = vadd.f32 %v1351, 1.0
      %v1355 = vadd.f32 %v1353, 1.0
      %v1356 = vlog2.pop %v1354
      %v1357 = vmul.f32 %v1356, 0.6931472
      %v1358 = vlog2.pop %v1355
      %v1359 = vmul.f32 %v1358, 0.6931472
      %v1360 = vadd.f32 %v1344, %v1357
      %v1361 = vadd.f32 %v1345, %v1359
      %vm1362 = vcmask 31768
      %v1363 = vsel %vm1362, %v1327, 0.0
      %v1364 = vsel %vm1362, %v1332, 0.0
      %v1365 = vadd.f32 %v1363, %v1364
      %v1366 = vrot.slane %v1365, 4
      %v1367 = vadd.f32 %v1365, %v1366
      %v1368 = vrot.slane %v1367, 2
      %v1369 = vadd.f32 %v1367, %v1368
      %v1370 = vrot.slane %v1369, 1
      %v1371 = vadd.f32 %v1369, %v1370
      %v1372 = vadd.f32 %v1371, %v1335
      %vm1373 = vcmask 23552
      %1374 = vst.msk [vmem:[%s406] sm:$0xff] %vm1373, %v1360
      %1375 = vst.msk [vmem:[%s406 + $0x8] sm:$0xff] %vm1373, %v1361
      %v1376 = vlaneseq
      %v1377 = vshrl.u32 %v1376, 7
      %v1378 = vsub.s32 0, %v1377
      %v1379 = vrot.slane %v1372, %v1378
      %1380 = vst.msk [vmem:[%s406] sm:$0xff] %vm1362, %v1379
      %1381 = vst.msk [vmem:[%s406 + $0x8] sm:$0xff] %vm1362, %v1379
      %p1382 = scmp.lt.s32.totalorder %s22, 3
      %s1383 = scalar_select %p1382, %s22, 3
      %s1384 = smul.addr %s1383, 2
      %s1385 = smul.addr %s1384, 8
      %s1386 = scalar_lea.vmem %s11, %s1385
      // Predicated region
      $region65: #{a2c_forward.1} parent=63 // pred_check
        %p1387 = pneg %p281
      $region66: #{a2c_forward.1} parent=63 // pred_check_branch
        %1389 = sbr.rel (%p1387) target = $region68
      $region67: #{a2c_forward.1} parent=63 // pred_region
        _
      $region68: #{a2c_forward.1} parent=63 // pred_fallthru
        _
    $region64: #{a2c_forward.1} parent=5 // pred_fallthru
      _
    %p1390 = scmp.le.s32.totalorder 2, %s17
    // Predicated region
    $region69: #{a2c_forward.1} parent=5 // pred_check
      %p1391 = pneg %p1390
    $region70: #{a2c_forward.1} parent=5 // pred_check_branch
      %1393 = sbr.rel (%p1391) target = $region72
    $region71: #{a2c_forward.1} parent=5 // pred_region
      %s1394 = ssub.s32 %s17, 2
      // Predicated region
      $region73: #{a2c_forward.1} parent=71 // pred_check
        %p1395 = pneg %p287
      $region74: #{a2c_forward.1} parent=71 // pred_check_branch
        %1397 = sbr.rel (%p1395) target = $region76
      $region75: #{a2c_forward.1} parent=71 // pred_region
        %p1398 = scmp.lt.s32.totalorder %s23, 3
        %s1399 = scalar_select %p1398, %s23, 3
        %s1400 = smul.addr %s1399, 2
        %s1401 = smul.addr %s1400, 8
        %s1402 = scalar_lea.vmem %s11, %s1401
      $region76: #{a2c_forward.1} parent=71 // pred_fallthru
        _
    $region72: #{a2c_forward.1} parent=5 // pred_fallthru
      _
  $region6: #{a2c_forward.1} parent=0 // loop_footer
    %s21 = sadd.s32 1, %s17
  $region7: #{a2c_forward.1} parent=0 // loop_footer_branch
    %16 = sbr.rel target = $region3
  $region8: #{a2c_forward.1} parent=0 // loop_exit
    _

</llo_original>
